<compile_context>
chip_gen: v6e
topology: v6e:2x2x1
jax: 0.10.0
libtpu: 0.0.40
codegen_flags: <defaults>
</compile_context>

<pallas_src>
import numpy as np
import jax
import jax.numpy as jnp
from jax import lax
from jax.experimental import pallas as pl
from jax.experimental.pallas import tpu as pltpu


# -----------------------------------------------------------------------------
# Fused Conv(3x3, s2, p1) + bias + ReLU + BatchNorm (training statistics).
#
#   p   : (rows, K)    bf16  im2col patches, rows = N*Ho*Wo, K = 9*Cin (padded)
#   wT  : (Cout, K)    bf16  conv weight, rows match patch feature ordering
#   pk  : (Cout, 3)    f32   packed per-channel [bias | gamma | beta]
#   out : (Cout, rows)       lane-dense (channels on sublanes, pixels on lanes)
# -----------------------------------------------------------------------------
def conv_bn_kernel(p_ref, wT_ref, pk_ref, o_ref):
    # MXU: (Cout, K) x (rows, K)^T -> (Cout, rows); bf16 operands, f32 acc.
    y = lax.dot_general(
        wT_ref[...], p_ref[...],
        dimension_numbers=(((1,), (1,)), ((), ())),
        preferred_element_type=jnp.float32,
    )
    pk = pk_ref[...]
    bias, gamma, beta = pk[:, 0:1], pk[:, 1:2], pk[:, 2:3]
    y = jnp.maximum(y + bias, 0.0)                               # bias + ReLU (f32)

    # BatchNorm2d training-mode stats over (N, H, W) == lane axis, biased var,
    # eps = 1e-5 (PyTorch default).  All statistics kept in f32.
    mean = jnp.mean(y, axis=1, keepdims=True)
    centered = y - mean
    var = jnp.mean(centered * centered, axis=1, keepdims=True)
    scale = gamma * lax.rsqrt(var + 1e-5)                        # rsqrt on the EUP
    o_ref[...] = (centered * scale + beta).astype(o_ref.dtype)   # one FMA / element


def conv_bn_block(p, wT, packed, out_dtype):
    cout = wT.shape[0]
    rows = p.shape[0]
    out_bytes = cout * rows * jnp.dtype(out_dtype).itemsize
    in_bytes = (p.size * p.dtype.itemsize
                + wT.size * wT.dtype.itemsize
                + packed.size * packed.dtype.itemsize)
    # Whole operands are VMEM-resident (no grid); size the scoped VMEM limit
    # explicitly so the kernel stays portable across v5e / v6e / v7x.
    vmem_limit = int(min(64 * 1024 * 1024, 2 * (in_bytes + out_bytes) + (4 << 20)))
    return pl.pallas_call(
        conv_bn_kernel,
        out_shape=jax.ShapeDtypeStruct((cout, rows), out_dtype),
        in_specs=[pl.BlockSpec(memory_space=pltpu.MemorySpace.VMEM)] * 3,
        out_specs=pl.BlockSpec(memory_space=pltpu.MemorySpace.VMEM),
        compiler_params=pltpu.CompilerParams(vmem_limit_bytes=vmem_limit),
    )(p, wT, packed)


# -----------------------------------------------------------------------------
# Wrapper glue (fused by jit): im2col on a channel-first activation, with
# feature ordering (dy, dx, cin) and zero-padding of the feature dim to k_out.
# -----------------------------------------------------------------------------
def _im2col_rows(x_cnhw, k_out, k=3, stride=2, pad=1):
    C, N, H, W = x_cnhw.shape
    Ho = (H + 2 * pad - k) // stride + 1
    Wo = (W + 2 * pad - k) // stride + 1
    xp = jnp.pad(x_cnhw, ((0, 0), (0, 0), (pad, pad), (pad, pad)))
    taps = []
    for dy in range(k):
        for dx in range(k):
            taps.append(xp[:, :, dy:dy + stride * Ho:stride, dx:dx + stride * Wo:stride])
    t = jnp.stack(taps, axis=0)                     # (9, C, N, Ho, Wo)
    patches = jnp.transpose(t, (2, 3, 4, 0, 1))     # (N, Ho, Wo, 9, C)
    patches = patches.reshape(N * Ho * Wo, k * k * C)
    if k_out > k * k * C:
        patches = jnp.pad(patches, ((0, 0), (0, k_out - k * k * C)))
    return patches.astype(jnp.bfloat16), (N, Ho, Wo)


def _forward(img_nchw, params):
    """ConvInputNN forward.  img: (N, Cin, H, W) -> (N, 24, H/16, W/16) f32."""
    x = jnp.transpose(img_nchw.astype(jnp.float32), (1, 0, 2, 3))  # (Cin, N, H, W)
    n_layers = len(params)
    for li, (wT, packed) in enumerate(params):
        p, (N, Ho, Wo) = _im2col_rows(x, k_out=wT.shape[1])
        out_dtype = jnp.float32 if li == n_layers - 1 else jnp.bfloat16
        y = conv_bn_block(p, wT, packed, out_dtype)                # (24, rows)
        x = y.reshape(y.shape[0], N, Ho, Wo)                       # stay channel-first
    return jnp.transpose(x, (1, 0, 2, 3))                          # NCHW like PyTorch


conv_input_nn = jax.jit(_forward)


# -----------------------------------------------------------------------------
# Deterministic parameter init (PyTorch-default-style uniform fan-in init;
# BatchNorm gamma=1, beta=0).  Layer-1 K dim zero-padded 27 -> 32.
# -----------------------------------------------------------------------------
def init_conv_params(key, cin, cout=24, k=3, k_pad=None):
    kw, kb = jax.random.split(key)
    fan_in = cin * k * k
    bound = 1.0 / np.sqrt(fan_in)
    # (kh, kw, cin, cout): rows of the reshaped weight match im2col's (dy, dx, cin).
    w = jax.random.uniform(kw, (k, k, cin, cout), jnp.float32, -bound, bound)
    b = jax.random.uniform(kb, (cout,), jnp.float32, -bound, bound)
    wflat = w.reshape(k * k * cin, cout)
    if k_pad is not None and k_pad > k * k * cin:
        wflat = jnp.pad(wflat, ((0, k_pad - k * k * cin), (0, 0)))
    wT = wflat.T.astype(jnp.bfloat16)                              # (cout, K)
    gamma = jnp.ones((cout,), jnp.float32)
    beta = jnp.zeros((cout,), jnp.float32)
    packed = jnp.stack([b, gamma, beta], axis=1)                   # (cout, 3)
    return wT, packed


if __name__ == "__main__":
    B, C_IN, H, W = 2, 3, 64, 64   # small shapes; 4 stride-2 convs -> 4x4 spatial

    key = jax.random.PRNGKey(0)
    keys = jax.random.split(key, 5)
    img = jax.random.normal(keys[0], (B, C_IN, H, W), jnp.float32)  # NCHW like PyTorch

    params = []
    cin = C_IN
    for i in range(4):
        params.append(init_conv_params(keys[i + 1], cin, 24, k_pad=32 if i == 0 else None))
        cin = 24

    out = conv_input_nn(img, params)
    jax.block_until_ready(out)
    assert out.shape == (B, 24, H // 16, W // 16) and out.dtype == jnp.float32
    print("KERNEL_OK")
</pallas_src>

<mosaic_0001>
module attributes {stable_mosaic.version = 11 : i64} {
  func.func @conv_bn_kernel(%arg0: memref<2048x32xbf16, #tpu.memory_space<vmem>>, %arg1: memref<24x32xbf16, #tpu.memory_space<vmem>>, %arg2: memref<24x3xf32, #tpu.memory_space<vmem>>, %arg3: memref<24x2048xbf16, #tpu.memory_space<vmem>>) attributes {dimension_semantics = [], scalar_prefetch = 0 : i64, scratch_operands = 0 : i64, tpu.core_type = #tpu.core_type<tc>} {
    %c0 = arith.constant 0 : index
    %c0_0 = arith.constant 0 : index
    %0 = vector.load %arg1[%c0, %c0_0] : memref<24x32xbf16, #tpu.memory_space<vmem>>, vector<24x32xbf16>
    %c0_1 = arith.constant 0 : index
    %c0_2 = arith.constant 0 : index
    %1 = vector.load %arg0[%c0_1, %c0_2] : memref<2048x32xbf16, #tpu.memory_space<vmem>>, vector<2048x32xbf16>
    %cst = arith.constant dense<0.000000e+00> : vector<24x2048xf32>
    %2 = tpu.matmul %0, %1, %cst {dimension_numbers = #tpu.dot_dimension_numbers<[1], [1], [0], [0], [0, 0, 1, 0], [], []>} : vector<24x32xbf16>, vector<2048x32xbf16>, vector<24x2048xf32> -> vector<24x2048xf32>
    %c0_3 = arith.constant 0 : index
    %c0_4 = arith.constant 0 : index
    %3 = vector.load %arg2[%c0_3, %c0_4] : memref<24x3xf32, #tpu.memory_space<vmem>>, vector<24x3xf32>
    %4 = vector.extract_strided_slice %3 {offsets = [0, 0], sizes = [24, 1], strides = [1, 1]} : vector<24x3xf32> to vector<24x1xf32>
    %5 = vector.extract_strided_slice %3 {offsets = [0, 1], sizes = [24, 1], strides = [1, 1]} : vector<24x3xf32> to vector<24x1xf32>
    %6 = vector.extract_strided_slice %3 {offsets = [0, 2], sizes = [24, 1], strides = [1, 1]} : vector<24x3xf32> to vector<24x1xf32>
    %7 = vector.broadcast %4 : vector<24x1xf32> to vector<24x2048xf32>
    %8 = arith.addf %2, %7 : vector<24x2048xf32>
    %cst_5 = arith.constant 0.000000e+00 : f32
    %9 = vector.broadcast %cst_5 : f32 to vector<24x2048xf32>
    %10 = arith.maximumf %8, %9 : vector<24x2048xf32>
    %cst_6 = arith.constant dense<0.000000e+00> : vector<24xf32>
    %11 = vector.multi_reduction <add>, %10, %cst_6 [1] : vector<24x2048xf32> to vector<24xf32>
    %12 = vector.shape_cast %11 : vector<24xf32> to vector<24x1xf32>
    %cst_7 = arith.constant 2.048000e+03 : f32
    %13 = vector.broadcast %cst_7 : f32 to vector<24x1xf32>
    %14 = arith.divf %12, %13 : vector<24x1xf32>
    %15 = vector.broadcast %14 : vector<24x1xf32> to vector<24x2048xf32>
    %16 = arith.subf %10, %15 : vector<24x2048xf32>
    %17 = arith.mulf %16, %16 : vector<24x2048xf32>
    %cst_8 = arith.constant dense<0.000000e+00> : vector<24xf32>
    %18 = vector.multi_reduction <add>, %17, %cst_8 [1] : vector<24x2048xf32> to vector<24xf32>
    %19 = vector.shape_cast %18 : vector<24xf32> to vector<24x1xf32>
    %cst_9 = arith.constant 2.048000e+03 : f32
    %20 = vector.broadcast %cst_9 : f32 to vector<24x1xf32>
    %21 = arith.divf %19, %20 : vector<24x1xf32>
    %cst_10 = arith.constant 9.99999974E-6 : f32
    %22 = vector.broadcast %cst_10 : f32 to vector<24x1xf32>
    %23 = arith.addf %21, %22 : vector<24x1xf32>
    %24 = math.rsqrt %23 : vector<24x1xf32>
    %25 = arith.mulf %5, %24 : vector<24x1xf32>
    %26 = vector.broadcast %25 : vector<24x1xf32> to vector<24x2048xf32>
    %27 = arith.mulf %16, %26 : vector<24x2048xf32>
    %28 = vector.broadcast %6 : vector<24x1xf32> to vector<24x2048xf32>
    %29 = arith.addf %27, %28 : vector<24x2048xf32>
    %30 = arith.truncf %29 : vector<24x2048xf32> to vector<24x2048xbf16>
    %c0_11 = arith.constant 0 : index
    %c0_12 = arith.constant 0 : index
    %31 = vector.load %arg3[%c0_11, %c0_12] : memref<24x2048xbf16, #tpu.memory_space<vmem>>, vector<24x2048xbf16>
    tpu.vector_store %arg3[%c0_11, %c0_12], %30 {strides = array<i32>} : memref<24x2048xbf16, #tpu.memory_space<vmem>>, vector<24x2048xbf16>,
    return
  }
}

module attributes {stable_mosaic.version = 11 : i64} {
  func.func @conv_bn_kernel(%arg0: memref<512x216xbf16, #tpu.memory_space<vmem>>, %arg1: memref<24x216xbf16, #tpu.memory_space<vmem>>, %arg2: memref<24x3xf32, #tpu.memory_space<vmem>>, %arg3: memref<24x512xbf16, #tpu.memory_space<vmem>>) attributes {dimension_semantics = [], scalar_prefetch = 0 : i64, scratch_operands = 0 : i64, tpu.core_type = #tpu.core_type<tc>} {
    %c0 = arith.constant 0 : index
    %c0_0 = arith.constant 0 : index
    %0 = vector.load %arg1[%c0, %c0_0] : memref<24x216xbf16, #tpu.memory_space<vmem>>, vector<24x216xbf16>
    %c0_1 = arith.constant 0 : index
    %c0_2 = arith.constant 0 : index
    %1 = vector.load %arg0[%c0_1, %c0_2] : memref<512x216xbf16, #tpu.memory_space<vmem>>, vector<512x216xbf16>
    %cst = arith.constant dense<0.000000e+00> : vector<24x512xf32>
    %2 = tpu.matmul %0, %1, %cst {dimension_numbers = #tpu.dot_dimension_numbers<[1], [1], [0], [0], [0, 0, 1, 0], [], []>} : vector<24x216xbf16>, vector<512x216xbf16>, vector<24x512xf32> -> vector<24x512xf32>
    %c0_3 = arith.constant 0 : index
    %c0_4 = arith.constant 0 : index
    %3 = vector.load %arg2[%c0_3, %c0_4] : memref<24x3xf32, #tpu.memory_space<vmem>>, vector<24x3xf32>
    %4 = vector.extract_strided_slice %3 {offsets = [0, 0], sizes = [24, 1], strides = [1, 1]} : vector<24x3xf32> to vector<24x1xf32>
    %5 = vector.extract_strided_slice %3 {offsets = [0, 1], sizes = [24, 1], strides = [1, 1]} : vector<24x3xf32> to vector<24x1xf32>
    %6 = vector.extract_strided_slice %3 {offsets = [0, 2], sizes = [24, 1], strides = [1, 1]} : vector<24x3xf32> to vector<24x1xf32>
    %7 = vector.broadcast %4 : vector<24x1xf32> to vector<24x512xf32>
    %8 = arith.addf %2, %7 : vector<24x512xf32>
    %cst_5 = arith.constant 0.000000e+00 : f32
    %9 = vector.broadcast %cst_5 : f32 to vector<24x512xf32>
    %10 = arith.maximumf %8, %9 : vector<24x512xf32>
    %cst_6 = arith.constant dense<0.000000e+00> : vector<24xf32>
    %11 = vector.multi_reduction <add>, %10, %cst_6 [1] : vector<24x512xf32> to vector<24xf32>
    %12 = vector.shape_cast %11 : vector<24xf32> to vector<24x1xf32>
    %cst_7 = arith.constant 5.120000e+02 : f32
    %13 = vector.broadcast %cst_7 : f32 to vector<24x1xf32>
    %14 = arith.divf %12, %13 : vector<24x1xf32>
    %15 = vector.broadcast %14 : vector<24x1xf32> to vector<24x512xf32>
    %16 = arith.subf %10, %15 : vector<24x512xf32>
    %17 = arith.mulf %16, %16 : vector<24x512xf32>
    %cst_8 = arith.constant dense<0.000000e+00> : vector<24xf32>
    %18 = vector.multi_reduction <add>, %17, %cst_8 [1] : vector<24x512xf32> to vector<24xf32>
    %19 = vector.shape_cast %18 : vector<24xf32> to vector<24x1xf32>
    %cst_9 = arith.constant 5.120000e+02 : f32
    %20 = vector.broadcast %cst_9 : f32 to vector<24x1xf32>
    %21 = arith.divf %19, %20 : vector<24x1xf32>
    %cst_10 = arith.constant 9.99999974E-6 : f32
    %22 = vector.broadcast %cst_10 : f32 to vector<24x1xf32>
    %23 = arith.addf %21, %22 : vector<24x1xf32>
    %24 = math.rsqrt %23 : vector<24x1xf32>
    %25 = arith.mulf %5, %24 : vector<24x1xf32>
    %26 = vector.broadcast %25 : vector<24x1xf32> to vector<24x512xf32>
    %27 = arith.mulf %16, %26 : vector<24x512xf32>
    %28 = vector.broadcast %6 : vector<24x1xf32> to vector<24x512xf32>
    %29 = arith.addf %27, %28 : vector<24x512xf32>
    %30 = arith.truncf %29 : vector<24x512xf32> to vector<24x512xbf16>
    %c0_11 = arith.constant 0 : index
    %c0_12 = arith.constant 0 : index
    %31 = vector.load %arg3[%c0_11, %c0_12] : memref<24x512xbf16, #tpu.memory_space<vmem>>, vector<24x512xbf16>
    tpu.vector_store %arg3[%c0_11, %c0_12], %30 {strides = array<i32>} : memref<24x512xbf16, #tpu.memory_space<vmem>>, vector<24x512xbf16>,
    return
  }
}

module attributes {stable_mosaic.version = 11 : i64} {
  func.func @conv_bn_kernel(%arg0: memref<128x216xbf16, #tpu.memory_space<vmem>>, %arg1: memref<24x216xbf16, #tpu.memory_space<vmem>>, %arg2: memref<24x3xf32, #tpu.memory_space<vmem>>, %arg3: memref<24x128xbf16, #tpu.memory_space<vmem>>) attributes {dimension_semantics = [], scalar_prefetch = 0 : i64, scratch_operands = 0 : i64, tpu.core_type = #tpu.core_type<tc>} {
    %c0 = arith.constant 0 : index
    %c0_0 = arith.constant 0 : index
    %0 = vector.load %arg1[%c0, %c0_0] : memref<24x216xbf16, #tpu.memory_space<vmem>>, vector<24x216xbf16>
    %c0_1 = arith.constant 0 : index
    %c0_2 = arith.constant 0 : index
    %1 = vector.load %arg0[%c0_1, %c0_2] : memref<128x216xbf16, #tpu.memory_space<vmem>>, vector<128x216xbf16>
    %cst = arith.constant dense<0.000000e+00> : vector<24x128xf32>
    %2 = tpu.matmul %0, %1, %cst {dimension_numbers = #tpu.dot_dimension_numbers<[1], [1], [0], [0], [0, 0, 1, 0], [], []>} : vector<24x216xbf16>, vector<128x216xbf16>, vector<24x128xf32> -> vector<24x128xf32>
    %c0_3 = arith.constant 0 : index
    %c0_4 = arith.constant 0 : index
    %3 = vector.load %arg2[%c0_3, %c0_4] : memref<24x3xf32, #tpu.memory_space<vmem>>, vector<24x3xf32>
    %4 = vector.extract_strided_slice %3 {offsets = [0, 0], sizes = [24, 1], strides = [1, 1]} : vector<24x3xf32> to vector<24x1xf32>
    %5 = vector.extract_strided_slice %3 {offsets = [0, 1], sizes = [24, 1], strides = [1, 1]} : vector<24x3xf32> to vector<24x1xf32>
    %6 = vector.extract_strided_slice %3 {offsets = [0, 2], sizes = [24, 1], strides = [1, 1]} : vector<24x3xf32> to vector<24x1xf32>
    %7 = vector.broadcast %4 : vector<24x1xf32> to vector<24x128xf32>
    %8 = arith.addf %2, %7 : vector<24x128xf32>
    %cst_5 = arith.constant 0.000000e+00 : f32
    %9 = vector.broadcast %cst_5 : f32 to vector<24x128xf32>
    %10 = arith.maximumf %8, %9 : vector<24x128xf32>
    %cst_6 = arith.constant dense<0.000000e+00> : vector<24xf32>
    %11 = vector.multi_reduction <add>, %10, %cst_6 [1] : vector<24x128xf32> to vector<24xf32>
    %12 = vector.shape_cast %11 : vector<24xf32> to vector<24x1xf32>
    %cst_7 = arith.constant 1.280000e+02 : f32
    %13 = vector.broadcast %cst_7 : f32 to vector<24x1xf32>
    %14 = arith.divf %12, %13 : vector<24x1xf32>
    %15 = vector.broadcast %14 : vector<24x1xf32> to vector<24x128xf32>
    %16 = arith.subf %10, %15 : vector<24x128xf32>
    %17 = arith.mulf %16, %16 : vector<24x128xf32>
    %cst_8 = arith.constant dense<0.000000e+00> : vector<24xf32>
    %18 = vector.multi_reduction <add>, %17, %cst_8 [1] : vector<24x128xf32> to vector<24xf32>
    %19 = vector.shape_cast %18 : vector<24xf32> to vector<24x1xf32>
    %cst_9 = arith.constant 1.280000e+02 : f32
    %20 = vector.broadcast %cst_9 : f32 to vector<24x1xf32>
    %21 = arith.divf %19, %20 : vector<24x1xf32>
    %cst_10 = arith.constant 9.99999974E-6 : f32
    %22 = vector.broadcast %cst_10 : f32 to vector<24x1xf32>
    %23 = arith.addf %21, %22 : vector<24x1xf32>
    %24 = math.rsqrt %23 : vector<24x1xf32>
    %25 = arith.mulf %5, %24 : vector<24x1xf32>
    %26 = vector.broadcast %25 : vector<24x1xf32> to vector<24x128xf32>
    %27 = arith.mulf %16, %26 : vector<24x128xf32>
    %28 = vector.broadcast %6 : vector<24x1xf32> to vector<24x128xf32>
    %29 = arith.addf %27, %28 : vector<24x128xf32>
    %30 = arith.truncf %29 : vector<24x128xf32> to vector<24x128xbf16>
    %c0_11 = arith.constant 0 : index
    %c0_12 = arith.constant 0 : index
    %31 = vector.load %arg3[%c0_11, %c0_12] : memref<24x128xbf16, #tpu.memory_space<vmem>>, vector<24x128xbf16>
    tpu.vector_store %arg3[%c0_11, %c0_12], %30 {strides = array<i32>} : memref<24x128xbf16, #tpu.memory_space<vmem>>, vector<24x128xbf16>,
    return
  }
}

module attributes {stable_mosaic.version = 11 : i64} {
  func.func @conv_bn_kernel(%arg0: memref<32x216xbf16, #tpu.memory_space<vmem>>, %arg1: memref<24x216xbf16, #tpu.memory_space<vmem>>, %arg2: memref<24x3xf32, #tpu.memory_space<vmem>>, %arg3: memref<24x32xf32, #tpu.memory_space<vmem>>) attributes {dimension_semantics = [], scalar_prefetch = 0 : i64, scratch_operands = 0 : i64, tpu.core_type = #tpu.core_type<tc>} {
    %c0 = arith.constant 0 : index
    %c0_0 = arith.constant 0 : index
    %0 = vector.load %arg1[%c0, %c0_0] : memref<24x216xbf16, #tpu.memory_space<vmem>>, vector<24x216xbf16>
    %c0_1 = arith.constant 0 : index
    %c0_2 = arith.constant 0 : index
    %1 = vector.load %arg0[%c0_1, %c0_2] : memref<32x216xbf16, #tpu.memory_space<vmem>>, vector<32x216xbf16>
    %cst = arith.constant dense<0.000000e+00> : vector<24x32xf32>
    %2 = tpu.matmul %0, %1, %cst {dimension_numbers = #tpu.dot_dimension_numbers<[1], [1], [0], [0], [0, 0, 1, 0], [], []>} : vector<24x216xbf16>, vector<32x216xbf16>, vector<24x32xf32> -> vector<24x32xf32>
    %c0_3 = arith.constant 0 : index
    %c0_4 = arith.constant 0 : index
    %3 = vector.load %arg2[%c0_3, %c0_4] : memref<24x3xf32, #tpu.memory_space<vmem>>, vector<24x3xf32>
    %4 = vector.extract_strided_slice %3 {offsets = [0, 0], sizes = [24, 1], strides = [1, 1]} : vector<24x3xf32> to vector<24x1xf32>
    %5 = vector.extract_strided_slice %3 {offsets = [0, 1], sizes = [24, 1], strides = [1, 1]} : vector<24x3xf32> to vector<24x1xf32>
    %6 = vector.extract_strided_slice %3 {offsets = [0, 2], sizes = [24, 1], strides = [1, 1]} : vector<24x3xf32> to vector<24x1xf32>
    %7 = vector.broadcast %4 : vector<24x1xf32> to vector<24x32xf32>
    %8 = arith.addf %2, %7 : vector<24x32xf32>
    %cst_5 = arith.constant 0.000000e+00 : f32
    %9 = vector.broadcast %cst_5 : f32 to vector<24x32xf32>
    %10 = arith.maximumf %8, %9 : vector<24x32xf32>
    %cst_6 = arith.constant dense<0.000000e+00> : vector<24xf32>
    %11 = vector.multi_reduction <add>, %10, %cst_6 [1] : vector<24x32xf32> to vector<24xf32>
    %12 = vector.shape_cast %11 : vector<24xf32> to vector<24x1xf32>
    %cst_7 = arith.constant 3.200000e+01 : f32
    %13 = vector.broadcast %cst_7 : f32 to vector<24x1xf32>
    %14 = arith.divf %12, %13 : vector<24x1xf32>
    %15 = vector.broadcast %14 : vector<24x1xf32> to vector<24x32xf32>
    %16 = arith.subf %10, %15 : vector<24x32xf32>
    %17 = arith.mulf %16, %16 : vector<24x32xf32>
    %cst_8 = arith.constant dense<0.000000e+00> : vector<24xf32>
    %18 = vector.multi_reduction <add>, %17, %cst_8 [1] : vector<24x32xf32> to vector<24xf32>
    %19 = vector.shape_cast %18 : vector<24xf32> to vector<24x1xf32>
    %cst_9 = arith.constant 3.200000e+01 : f32
    %20 = vector.broadcast %cst_9 : f32 to vector<24x1xf32>
    %21 = arith.divf %19, %20 : vector<24x1xf32>
    %cst_10 = arith.constant 9.99999974E-6 : f32
    %22 = vector.broadcast %cst_10 : f32 to vector<24x1xf32>
    %23 = arith.addf %21, %22 : vector<24x1xf32>
    %24 = math.rsqrt %23 : vector<24x1xf32>
    %25 = arith.mulf %5, %24 : vector<24x1xf32>
    %26 = vector.broadcast %25 : vector<24x1xf32> to vector<24x32xf32>
    %27 = arith.mulf %16, %26 : vector<24x32xf32>
    %28 = vector.broadcast %6 : vector<24x1xf32> to vector<24x32xf32>
    %29 = arith.addf %27, %28 : vector<24x32xf32>
    %c0_11 = arith.constant 0 : index
    %c0_12 = arith.constant 0 : index
    %30 = vector.load %arg3[%c0_11, %c0_12] : memref<24x32xf32, #tpu.memory_space<vmem>>, vector<24x32xf32>
    tpu.vector_store %arg3[%c0_11, %c0_12], %29 {strides = array<i32>} : memref<24x32xf32, #tpu.memory_space<vmem>>, vector<24x32xf32>,
    return
  }
}

</mosaic_0001>

<llo_original>
// kernel: _forward.4
$region0: #{_forward.4}
  #allocation0 [shape = 'u32[]', space=smem, size = 0x4, offset = 0x4, fixed_abs, tag = 'smem constant byte address 0x4 - core index']
  #allocation1 [shape = 'u32[144,128]{1,0:T(1,128)}', space=vmem, size = 0x12000, scoped, tag = 'internal scratch']
  %s0 = inlined_call_operand.vmem [shape: bf16[2048,32], index: 0, kind: input, shape index: {}]
  %s1 = inlined_call_operand.vmem [shape: bf16[24,32], index: 1, kind: input, shape index: {}]
  %s2 = inlined_call_operand.vmem [shape: f32[24,3], index: 2, kind: input, shape index: {}]
  %s3 = inlined_call_operand.vmem [shape: bf16[24,2048], index: 3, kind: output, shape index: {}]
  %s4 = sld [smem:[#allocation0]]
  $region22: #{_forward.4} parent=0
    _
  %s6 = ssub.s32 1, %s4
  %s7 = scalar_select 0, %s6, %s4
  // Predicated region
  $region2: #{_forward.4} parent=0 // pred_check
    _
  $region3: #{_forward.4} parent=0 // pred_check_branch
    %9 = sbr.rel (0) target = $region5
  $region4: #{_forward.4} parent=0 // pred_region
    _
  $region5: #{_forward.4} parent=0 // pred_fallthru
    _
  // Predicated region
  $region6: #{_forward.4} parent=0 // pred_check
    _
  $region7: #{_forward.4} parent=0 // pred_check_branch
    %11 = sbr.rel (0) target = $region9
  $region8: #{_forward.4} parent=0 // pred_region
    _
  $region9: #{_forward.4} parent=0 // pred_fallthru
    _
  // Predicated region
  $region10: #{_forward.4} parent=0 // pred_check
    _
  $region11: #{_forward.4} parent=0 // pred_check_branch
    %13 = sbr.rel (0) target = $region13
  $region12: #{_forward.4} parent=0 // pred_region
    _
  $region13: #{_forward.4} parent=0 // pred_fallthru
    _
  %v15 = vld [vmem:[%s1] sm:$0xf]
  %v16 = vld [vmem:[%s1 + $0x4] sm:$0xf]
  %v17 = vld [vmem:[%s1 + $0x8] sm:$0xf]
  %v18 = vld [vmem:[%s0] sm:$0xf]
  %v19 = vld [vmem:[%s0 + $0x4] sm:$0xf]
  %v20 = vld [vmem:[%s0 + $0x8] sm:$0xf]
  %v21 = vld [vmem:[%s0 + $0xc] sm:$0xf]
  %v22 = vld [vmem:[%s0 + $0x10] sm:$0xf]
  %v23 = vld [vmem:[%s0 + $0x14] sm:$0xf]
  %v24 = vld [vmem:[%s0 + $0x18] sm:$0xf]
  %v25 = vld [vmem:[%s0 + $0x1c] sm:$0xf]
  %v26 = vld [vmem:[%s0 + $0x20] sm:$0xf]
  %v27 = vld [vmem:[%s0 + $0x24] sm:$0xf]
  %v28 = vld [vmem:[%s0 + $0x28] sm:$0xf]
  %v29 = vld [vmem:[%s0 + $0x2c] sm:$0xf]
  %v30 = vld [vmem:[%s0 + $0x30] sm:$0xf]
  %v31 = vld [vmem:[%s0 + $0x34] sm:$0xf]
  %v32 = vld [vmem:[%s0 + $0x38] sm:$0xf]
  %v33 = vld [vmem:[%s0 + $0x3c] sm:$0xf]
  %v34 = vld [vmem:[%s0 + $0x40] sm:$0xf]
  %v35 = vld [vmem:[%s0 + $0x44] sm:$0xf]
  %v36 = vld [vmem:[%s0 + $0x48] sm:$0xf]
  %v37 = vld [vmem:[%s0 + $0x4c] sm:$0xf]
  %v38 = vld [vmem:[%s0 + $0x50] sm:$0xf]
  %v39 = vld [vmem:[%s0 + $0x54] sm:$0xf]
  %v40 = vld [vmem:[%s0 + $0x58] sm:$0xf]
  %v41 = vld [vmem:[%s0 + $0x5c] sm:$0xf]
  %v42 = vld [vmem:[%s0 + $0x60] sm:$0xf]
  %v43 = vld [vmem:[%s0 + $0x64] sm:$0xf]
  %v44 = vld [vmem:[%s0 + $0x68] sm:$0xf]
  %v45 = vld [vmem:[%s0 + $0x6c] sm:$0xf]
  %v46 = vld [vmem:[%s0 + $0x70] sm:$0xf]
  %v47 = vld [vmem:[%s0 + $0x74] sm:$0xf]
  %v48 = vld [vmem:[%s0 + $0x78] sm:$0xf]
  %v49 = vld [vmem:[%s0 + $0x7c] sm:$0xf]
  %v50 = vld [vmem:[%s0 + $0x80] sm:$0xf]
  %v51 = vld [vmem:[%s0 + $0x84] sm:$0xf]
  %v52 = vld [vmem:[%s0 + $0x88] sm:$0xf]
  %v53 = vld [vmem:[%s0 + $0x8c] sm:$0xf]
  %v54 = vld [vmem:[%s0 + $0x90] sm:$0xf]
  %v55 = vld [vmem:[%s0 + $0x94] sm:$0xf]
  %v56 = vld [vmem:[%s0 + $0x98] sm:$0xf]
  %v57 = vld [vmem:[%s0 + $0x9c] sm:$0xf]
  %v58 = vld [vmem:[%s0 + $0xa0] sm:$0xf]
  %v59 = vld [vmem:[%s0 + $0xa4] sm:$0xf]
  %v60 = vld [vmem:[%s0 + $0xa8] sm:$0xf]
  %v61 = vld [vmem:[%s0 + $0xac] sm:$0xf]
  %v62 = vld [vmem:[%s0 + $0xb0] sm:$0xf]
  %v63 = vld [vmem:[%s0 + $0xb4] sm:$0xf]
  %v64 = vld [vmem:[%s0 + $0xb8] sm:$0xf]
  %v65 = vld [vmem:[%s0 + $0xbc] sm:$0xf]
  %v66 = vld [vmem:[%s0 + $0xc0] sm:$0xf]
  %v67 = vld [vmem:[%s0 + $0xc4] sm:$0xf]
  %v68 = vld [vmem:[%s0 + $0xc8] sm:$0xf]
  %v69 = vld [vmem:[%s0 + $0xcc] sm:$0xf]
  %v70 = vld [vmem:[%s0 + $0xd0] sm:$0xf]
  %v71 = vld [vmem:[%s0 + $0xd4] sm:$0xf]
  %v72 = vld [vmem:[%s0 + $0xd8] sm:$0xf]
  %v73 = vld [vmem:[%s0 + $0xdc] sm:$0xf]
  %v74 = vld [vmem:[%s0 + $0xe0] sm:$0xf]
  %v75 = vld [vmem:[%s0 + $0xe4] sm:$0xf]
  %v76 = vld [vmem:[%s0 + $0xe8] sm:$0xf]
  %v77 = vld [vmem:[%s0 + $0xec] sm:$0xf]
  %v78 = vld [vmem:[%s0 + $0xf0] sm:$0xf]
  %v79 = vld [vmem:[%s0 + $0xf4] sm:$0xf]
  %v80 = vld [vmem:[%s0 + $0xf8] sm:$0xf]
  %v81 = vld [vmem:[%s0 + $0xfc] sm:$0xf]
  %v82 = vld [vmem:[%s0 + $0x100] sm:$0xf]
  %v83 = vld [vmem:[%s0 + $0x104] sm:$0xf]
  %v84 = vld [vmem:[%s0 + $0x108] sm:$0xf]
  %v85 = vld [vmem:[%s0 + $0x10c] sm:$0xf]
  %v86 = vld [vmem:[%s0 + $0x110] sm:$0xf]
  %v87 = vld [vmem:[%s0 + $0x114] sm:$0xf]
  %v88 = vld [vmem:[%s0 + $0x118] sm:$0xf]
  %v89 = vld [vmem:[%s0 + $0x11c] sm:$0xf]
  %v90 = vld [vmem:[%s0 + $0x120] sm:$0xf]
  %v91 = vld [vmem:[%s0 + $0x124] sm:$0xf]
  %v92 = vld [vmem:[%s0 + $0x128] sm:$0xf]
  %v93 = vld [vmem:[%s0 + $0x12c] sm:$0xf]
  %v94 = vld [vmem:[%s0 + $0x130] sm:$0xf]
  %v95 = vld [vmem:[%s0 + $0x134] sm:$0xf]
  %v96 = vld [vmem:[%s0 + $0x138] sm:$0xf]
  %v97 = vld [vmem:[%s0 + $0x13c] sm:$0xf]
  %v98 = vld [vmem:[%s0 + $0x140] sm:$0xf]
  %v99 = vld [vmem:[%s0 + $0x144] sm:$0xf]
  %v100 = vld [vmem:[%s0 + $0x148] sm:$0xf]
  %v101 = vld [vmem:[%s0 + $0x14c] sm:$0xf]
  %v102 = vld [vmem:[%s0 + $0x150] sm:$0xf]
  %v103 = vld [vmem:[%s0 + $0x154] sm:$0xf]
  %v104 = vld [vmem:[%s0 + $0x158] sm:$0xf]
  %v105 = vld [vmem:[%s0 + $0x15c] sm:$0xf]
  %v106 = vld [vmem:[%s0 + $0x160] sm:$0xf]
  %v107 = vld [vmem:[%s0 + $0x164] sm:$0xf]
  %v108 = vld [vmem:[%s0 + $0x168] sm:$0xf]
  %v109 = vld [vmem:[%s0 + $0x16c] sm:$0xf]
  %v110 = vld [vmem:[%s0 + $0x170] sm:$0xf]
  %v111 = vld [vmem:[%s0 + $0x174] sm:$0xf]
  %v112 = vld [vmem:[%s0 + $0x178] sm:$0xf]
  %v113 = vld [vmem:[%s0 + $0x17c] sm:$0xf]
  %v114 = vld [vmem:[%s0 + $0x180] sm:$0xf]
  %v115 = vld [vmem:[%s0 + $0x184] sm:$0xf]
  %v116 = vld [vmem:[%s0 + $0x188] sm:$0xf]
  %v117 = vld [vmem:[%s0 + $0x18c] sm:$0xf]
  %v118 = vld [vmem:[%s0 + $0x190] sm:$0xf]
  %v119 = vld [vmem:[%s0 + $0x194] sm:$0xf]
  %v120 = vld [vmem:[%s0 + $0x198] sm:$0xf]
  %v121 = vld [vmem:[%s0 + $0x19c] sm:$0xf]
  %v122 = vld [vmem:[%s0 + $0x1a0] sm:$0xf]
  %v123 = vld [vmem:[%s0 + $0x1a4] sm:$0xf]
  %v124 = vld [vmem:[%s0 + $0x1a8] sm:$0xf]
  %v125 = vld [vmem:[%s0 + $0x1ac] sm:$0xf]
  %v126 = vld [vmem:[%s0 + $0x1b0] sm:$0xf]
  %v127 = vld [vmem:[%s0 + $0x1b4] sm:$0xf]
  %v128 = vld [vmem:[%s0 + $0x1b8] sm:$0xf]
  %v129 = vld [vmem:[%s0 + $0x1bc] sm:$0xf]
  %v130 = vld [vmem:[%s0 + $0x1c0] sm:$0xf]
  %v131 = vld [vmem:[%s0 + $0x1c4] sm:$0xf]
  %v132 = vld [vmem:[%s0 + $0x1c8] sm:$0xf]
  %v133 = vld [vmem:[%s0 + $0x1cc] sm:$0xf]
  %v134 = vld [vmem:[%s0 + $0x1d0] sm:$0xf]
  %v135 = vld [vmem:[%s0 + $0x1d4] sm:$0xf]
  %v136 = vld [vmem:[%s0 + $0x1d8] sm:$0xf]
  %v137 = vld [vmem:[%s0 + $0x1dc] sm:$0xf]
  %v138 = vld [vmem:[%s0 + $0x1e0] sm:$0xf]
  %v139 = vld [vmem:[%s0 + $0x1e4] sm:$0xf]
  %v140 = vld [vmem:[%s0 + $0x1e8] sm:$0xf]
  %v141 = vld [vmem:[%s0 + $0x1ec] sm:$0xf]
  %v142 = vld [vmem:[%s0 + $0x1f0] sm:$0xf]
  %v143 = vld [vmem:[%s0 + $0x1f4] sm:$0xf]
  %v144 = vld [vmem:[%s0 + $0x1f8] sm:$0xf]
  %v145 = vld [vmem:[%s0 + $0x1fc] sm:$0xf]
  %v146 = vld [vmem:[%s0 + $0x200] sm:$0xf]
  %v147 = vld [vmem:[%s0 + $0x204] sm:$0xf]
  %v148 = vld [vmem:[%s0 + $0x208] sm:$0xf]
  %v149 = vld [vmem:[%s0 + $0x20c] sm:$0xf]
  %v150 = vld [vmem:[%s0 + $0x210] sm:$0xf]
  %v151 = vld [vmem:[%s0 + $0x214] sm:$0xf]
  %v152 = vld [vmem:[%s0 + $0x218] sm:$0xf]
  %v153 = vld [vmem:[%s0 + $0x21c] sm:$0xf]
  %v154 = vld [vmem:[%s0 + $0x220] sm:$0xf]
  %v155 = vld [vmem:[%s0 + $0x224] sm:$0xf]
  %v156 = vld [vmem:[%s0 + $0x228] sm:$0xf]
  %v157 = vld [vmem:[%s0 + $0x22c] sm:$0xf]
  %v158 = vld [vmem:[%s0 + $0x230] sm:$0xf]
  %v159 = vld [vmem:[%s0 + $0x234] sm:$0xf]
  %v160 = vld [vmem:[%s0 + $0x238] sm:$0xf]
  %v161 = vld [vmem:[%s0 + $0x23c] sm:$0xf]
  %v162 = vld [vmem:[%s0 + $0x240] sm:$0xf]
  %v163 = vld [vmem:[%s0 + $0x244] sm:$0xf]
  %v164 = vld [vmem:[%s0 + $0x248] sm:$0xf]
  %v165 = vld [vmem:[%s0 + $0x24c] sm:$0xf]
  %v166 = vld [vmem:[%s0 + $0x250] sm:$0xf]
  %v167 = vld [vmem:[%s0 + $0x254] sm:$0xf]
  %v168 = vld [vmem:[%s0 + $0x258] sm:$0xf]
  %v169 = vld [vmem:[%s0 + $0x25c] sm:$0xf]
  %v170 = vld [vmem:[%s0 + $0x260] sm:$0xf]
  %v171 = vld [vmem:[%s0 + $0x264] sm:$0xf]
  %v172 = vld [vmem:[%s0 + $0x268] sm:$0xf]
  %v173 = vld [vmem:[%s0 + $0x26c] sm:$0xf]
  %v174 = vld [vmem:[%s0 + $0x270] sm:$0xf]
  %v175 = vld [vmem:[%s0 + $0x274] sm:$0xf]
  %v176 = vld [vmem:[%s0 + $0x278] sm:$0xf]
  %v177 = vld [vmem:[%s0 + $0x27c] sm:$0xf]
  %v178 = vld [vmem:[%s0 + $0x280] sm:$0xf]
  %v179 = vld [vmem:[%s0 + $0x284] sm:$0xf]
  %v180 = vld [vmem:[%s0 + $0x288] sm:$0xf]
  %v181 = vld [vmem:[%s0 + $0x28c] sm:$0xf]
  %v182 = vld [vmem:[%s0 + $0x290] sm:$0xf]
  %v183 = vld [vmem:[%s0 + $0x294] sm:$0xf]
  %v184 = vld [vmem:[%s0 + $0x298] sm:$0xf]
  %v185 = vld [vmem:[%s0 + $0x29c] sm:$0xf]
  %v186 = vld [vmem:[%s0 + $0x2a0] sm:$0xf]
  %v187 = vld [vmem:[%s0 + $0x2a4] sm:$0xf]
  %v188 = vld [vmem:[%s0 + $0x2a8] sm:$0xf]
  %v189 = vld [vmem:[%s0 + $0x2ac] sm:$0xf]
  %v190 = vld [vmem:[%s0 + $0x2b0] sm:$0xf]
  %v191 = vld [vmem:[%s0 + $0x2b4] sm:$0xf]
  %v192 = vld [vmem:[%s0 + $0x2b8] sm:$0xf]
  %v193 = vld [vmem:[%s0 + $0x2bc] sm:$0xf]
  %v194 = vld [vmem:[%s0 + $0x2c0] sm:$0xf]
  %v195 = vld [vmem:[%s0 + $0x2c4] sm:$0xf]
  %v196 = vld [vmem:[%s0 + $0x2c8] sm:$0xf]
  %v197 = vld [vmem:[%s0 + $0x2cc] sm:$0xf]
  %v198 = vld [vmem:[%s0 + $0x2d0] sm:$0xf]
  %v199 = vld [vmem:[%s0 + $0x2d4] sm:$0xf]
  %v200 = vld [vmem:[%s0 + $0x2d8] sm:$0xf]
  %v201 = vld [vmem:[%s0 + $0x2dc] sm:$0xf]
  %v202 = vld [vmem:[%s0 + $0x2e0] sm:$0xf]
  %v203 = vld [vmem:[%s0 + $0x2e4] sm:$0xf]
  %v204 = vld [vmem:[%s0 + $0x2e8] sm:$0xf]
  %v205 = vld [vmem:[%s0 + $0x2ec] sm:$0xf]
  %v206 = vld [vmem:[%s0 + $0x2f0] sm:$0xf]
  %v207 = vld [vmem:[%s0 + $0x2f4] sm:$0xf]
  %v208 = vld [vmem:[%s0 + $0x2f8] sm:$0xf]
  %v209 = vld [vmem:[%s0 + $0x2fc] sm:$0xf]
  %v210 = vld [vmem:[%s0 + $0x300] sm:$0xf]
  %v211 = vld [vmem:[%s0 + $0x304] sm:$0xf]
  %v212 = vld [vmem:[%s0 + $0x308] sm:$0xf]
  %v213 = vld [vmem:[%s0 + $0x30c] sm:$0xf]
  %v214 = vld [vmem:[%s0 + $0x310] sm:$0xf]
  %v215 = vld [vmem:[%s0 + $0x314] sm:$0xf]
  %v216 = vld [vmem:[%s0 + $0x318] sm:$0xf]
  %v217 = vld [vmem:[%s0 + $0x31c] sm:$0xf]
  %v218 = vld [vmem:[%s0 + $0x320] sm:$0xf]
  %v219 = vld [vmem:[%s0 + $0x324] sm:$0xf]
  %v220 = vld [vmem:[%s0 + $0x328] sm:$0xf]
  %v221 = vld [vmem:[%s0 + $0x32c] sm:$0xf]
  %v222 = vld [vmem:[%s0 + $0x330] sm:$0xf]
  %v223 = vld [vmem:[%s0 + $0x334] sm:$0xf]
  %v224 = vld [vmem:[%s0 + $0x338] sm:$0xf]
  %v225 = vld [vmem:[%s0 + $0x33c] sm:$0xf]
  %v226 = vld [vmem:[%s0 + $0x340] sm:$0xf]
  %v227 = vld [vmem:[%s0 + $0x344] sm:$0xf]
  %v228 = vld [vmem:[%s0 + $0x348] sm:$0xf]
  %v229 = vld [vmem:[%s0 + $0x34c] sm:$0xf]
  %v230 = vld [vmem:[%s0 + $0x350] sm:$0xf]
  %v231 = vld [vmem:[%s0 + $0x354] sm:$0xf]
  %v232 = vld [vmem:[%s0 + $0x358] sm:$0xf]
  %v233 = vld [vmem:[%s0 + $0x35c] sm:$0xf]
  %v234 = vld [vmem:[%s0 + $0x360] sm:$0xf]
  %v235 = vld [vmem:[%s0 + $0x364] sm:$0xf]
  %v236 = vld [vmem:[%s0 + $0x368] sm:$0xf]
  %v237 = vld [vmem:[%s0 + $0x36c] sm:$0xf]
  %v238 = vld [vmem:[%s0 + $0x370] sm:$0xf]
  %v239 = vld [vmem:[%s0 + $0x374] sm:$0xf]
  %v240 = vld [vmem:[%s0 + $0x378] sm:$0xf]
  %v241 = vld [vmem:[%s0 + $0x37c] sm:$0xf]
  %v242 = vld [vmem:[%s0 + $0x380] sm:$0xf]
  %v243 = vld [vmem:[%s0 + $0x384] sm:$0xf]
  %v244 = vld [vmem:[%s0 + $0x388] sm:$0xf]
  %v245 = vld [vmem:[%s0 + $0x38c] sm:$0xf]
  %v246 = vld [vmem:[%s0 + $0x390] sm:$0xf]
  %v247 = vld [vmem:[%s0 + $0x394] sm:$0xf]
  %v248 = vld [vmem:[%s0 + $0x398] sm:$0xf]
  %v249 = vld [vmem:[%s0 + $0x39c] sm:$0xf]
  %v250 = vld [vmem:[%s0 + $0x3a0] sm:$0xf]
  %v251 = vld [vmem:[%s0 + $0x3a4] sm:$0xf]
  %v252 = vld [vmem:[%s0 + $0x3a8] sm:$0xf]
  %v253 = vld [vmem:[%s0 + $0x3ac] sm:$0xf]
  %v254 = vld [vmem:[%s0 + $0x3b0] sm:$0xf]
  %v255 = vld [vmem:[%s0 + $0x3b4] sm:$0xf]
  %v256 = vld [vmem:[%s0 + $0x3b8] sm:$0xf]
  %v257 = vld [vmem:[%s0 + $0x3bc] sm:$0xf]
  %v258 = vld [vmem:[%s0 + $0x3c0] sm:$0xf]
  %v259 = vld [vmem:[%s0 + $0x3c4] sm:$0xf]
  %v260 = vld [vmem:[%s0 + $0x3c8] sm:$0xf]
  %v261 = vld [vmem:[%s0 + $0x3cc] sm:$0xf]
  %v262 = vld [vmem:[%s0 + $0x3d0] sm:$0xf]
  %v263 = vld [vmem:[%s0 + $0x3d4] sm:$0xf]
  %v264 = vld [vmem:[%s0 + $0x3d8] sm:$0xf]
  %v265 = vld [vmem:[%s0 + $0x3dc] sm:$0xf]
  %v266 = vld [vmem:[%s0 + $0x3e0] sm:$0xf]
  %v267 = vld [vmem:[%s0 + $0x3e4] sm:$0xf]
  %v268 = vld [vmem:[%s0 + $0x3e8] sm:$0xf]
  %v269 = vld [vmem:[%s0 + $0x3ec] sm:$0xf]
  %v270 = vld [vmem:[%s0 + $0x3f0] sm:$0xf]
  %v271 = vld [vmem:[%s0 + $0x3f4] sm:$0xf]
  %v272 = vld [vmem:[%s0 + $0x3f8] sm:$0xf]
  %v273 = vld [vmem:[%s0 + $0x3fc] sm:$0xf]
  %v274 = vld [vmem:[%s2] sm:$0xff]
  %v275 = vld [vmem:[%s2 + $0x8] sm:$0xff]
  %v276 = vld [vmem:[%s2 + $0x10] sm:$0xff]
  %278 = vset.pattern.permute.xlu0 0
  %279 = vperm.xlu0 %278, %v274
  %v280 = vpop.permute.xlu0 %279
  %283 = vset.pattern.permute.xlu0 0
  %284 = vperm.xlu0 %283, %v275
  %v285 = vpop.permute.xlu0 %284
  %288 = vset.pattern.permute.xlu0 0
  %289 = vperm.xlu0 %288, %v276
  %v290 = vpop.permute.xlu0 %289
  %v295 = vunpack.c.l.b16 %v15
  %v296 = vunpack.c.l.b16 %v16
  %v297 = vunpack.c.l.b16 %v17
  %v298 = vpack.c.b16 %v296, %v295
  %v299 = vpack.c.b16 %v297, %v297
  %v556 = vunpack.c.l.b16 %v18
  %v557 = vunpack.c.l.b16 %v19
  %v558 = vunpack.c.l.b16 %v20
  %v559 = vunpack.c.l.b16 %v21
  %v560 = vunpack.c.l.b16 %v22
  %v561 = vunpack.c.l.b16 %v23
  %v562 = vunpack.c.l.b16 %v24
  %v563 = vunpack.c.l.b16 %v25
  %v564 = vunpack.c.l.b16 %v26
  %v565 = vunpack.c.l.b16 %v27
  %v566 = vunpack.c.l.b16 %v28
  %v567 = vunpack.c.l.b16 %v29
  %v568 = vunpack.c.l.b16 %v30
  %v569 = vunpack.c.l.b16 %v31
  %v570 = vunpack.c.l.b16 %v32
  %v571 = vunpack.c.l.b16 %v33
  %v572 = vunpack.c.l.b16 %v34
  %v573 = vunpack.c.l.b16 %v35
  %v574 = vunpack.c.l.b16 %v36
  %v575 = vunpack.c.l.b16 %v37
  %v576 = vunpack.c.l.b16 %v38
  %v577 = vunpack.c.l.b16 %v39
  %v578 = vunpack.c.l.b16 %v40
  %v579 = vunpack.c.l.b16 %v41
  %v580 = vunpack.c.l.b16 %v42
  %v581 = vunpack.c.l.b16 %v43
  %v582 = vunpack.c.l.b16 %v44
  %v583 = vunpack.c.l.b16 %v45
  %v584 = vunpack.c.l.b16 %v46
  %v585 = vunpack.c.l.b16 %v47
  %v586 = vunpack.c.l.b16 %v48
  %v587 = vunpack.c.l.b16 %v49
  %v588 = vunpack.c.l.b16 %v50
  %v589 = vunpack.c.l.b16 %v51
  %v590 = vunpack.c.l.b16 %v52
  %v591 = vunpack.c.l.b16 %v53
  %v592 = vunpack.c.l.b16 %v54
  %v593 = vunpack.c.l.b16 %v55
  %v594 = vunpack.c.l.b16 %v56
  %v595 = vunpack.c.l.b16 %v57
  %v596 = vunpack.c.l.b16 %v58
  %v597 = vunpack.c.l.b16 %v59
  %v598 = vunpack.c.l.b16 %v60
  %v599 = vunpack.c.l.b16 %v61
  %v600 = vunpack.c.l.b16 %v62
  %v601 = vunpack.c.l.b16 %v63
  %v602 = vunpack.c.l.b16 %v64
  %v603 = vunpack.c.l.b16 %v65
  %v604 = vunpack.c.l.b16 %v66
  %v605 = vunpack.c.l.b16 %v67
  %v606 = vunpack.c.l.b16 %v68
  %v607 = vunpack.c.l.b16 %v69
  %v608 = vunpack.c.l.b16 %v70
  %v609 = vunpack.c.l.b16 %v71
  %v610 = vunpack.c.l.b16 %v72
  %v611 = vunpack.c.l.b16 %v73
  %v612 = vunpack.c.l.b16 %v74
  %v613 = vunpack.c.l.b16 %v75
  %v614 = vunpack.c.l.b16 %v76
  %v615 = vunpack.c.l.b16 %v77
  %v616 = vunpack.c.l.b16 %v78
  %v617 = vunpack.c.l.b16 %v79
  %v618 = vunpack.c.l.b16 %v80
  %v619 = vunpack.c.l.b16 %v81
  %v620 = vunpack.c.l.b16 %v82
  %v621 = vunpack.c.l.b16 %v83
  %v622 = vunpack.c.l.b16 %v84
  %v623 = vunpack.c.l.b16 %v85
  %v624 = vunpack.c.l.b16 %v86
  %v625 = vunpack.c.l.b16 %v87
  %v626 = vunpack.c.l.b16 %v88
  %v627 = vunpack.c.l.b16 %v89
  %v628 = vunpack.c.l.b16 %v90
  %v629 = vunpack.c.l.b16 %v91
  %v630 = vunpack.c.l.b16 %v92
  %v631 = vunpack.c.l.b16 %v93
  %v632 = vunpack.c.l.b16 %v94
  %v633 = vunpack.c.l.b16 %v95
  %v634 = vunpack.c.l.b16 %v96
  %v635 = vunpack.c.l.b16 %v97
  %v636 = vunpack.c.l.b16 %v98
  %v637 = vunpack.c.l.b16 %v99
  %v638 = vunpack.c.l.b16 %v100
  %v639 = vunpack.c.l.b16 %v101
  %v640 = vunpack.c.l.b16 %v102
  %v641 = vunpack.c.l.b16 %v103
  %v642 = vunpack.c.l.b16 %v104
  %v643 = vunpack.c.l.b16 %v105
  %v644 = vunpack.c.l.b16 %v106
  %v645 = vunpack.c.l.b16 %v107
  %v646 = vunpack.c.l.b16 %v108
  %v647 = vunpack.c.l.b16 %v109
  %v648 = vunpack.c.l.b16 %v110
  %v649 = vunpack.c.l.b16 %v111
  %v650 = vunpack.c.l.b16 %v112
  %v651 = vunpack.c.l.b16 %v113
  %v652 = vunpack.c.l.b16 %v114
  %v653 = vunpack.c.l.b16 %v115
  %v654 = vunpack.c.l.b16 %v116
  %v655 = vunpack.c.l.b16 %v117
  %v656 = vunpack.c.l.b16 %v118
  %v657 = vunpack.c.l.b16 %v119
  %v658 = vunpack.c.l.b16 %v120
  %v659 = vunpack.c.l.b16 %v121
  %v660 = vunpack.c.l.b16 %v122
  %v661 = vunpack.c.l.b16 %v123
  %v662 = vunpack.c.l.b16 %v124
  %v663 = vunpack.c.l.b16 %v125
  %v664 = vunpack.c.l.b16 %v126
  %v665 = vunpack.c.l.b16 %v127
  %v666 = vunpack.c.l.b16 %v128
  %v667 = vunpack.c.l.b16 %v129
  %v668 = vunpack.c.l.b16 %v130
  %v669 = vunpack.c.l.b16 %v131
  %v670 = vunpack.c.l.b16 %v132
  %v671 = vunpack.c.l.b16 %v133
  %v672 = vunpack.c.l.b16 %v134
  %v673 = vunpack.c.l.b16 %v135
  %v674 = vunpack.c.l.b16 %v136
  %v675 = vunpack.c.l.b16 %v137
  %v676 = vunpack.c.l.b16 %v138
  %v677 = vunpack.c.l.b16 %v139
  %v678 = vunpack.c.l.b16 %v140
  %v679 = vunpack.c.l.b16 %v141
  %v680 = vunpack.c.l.b16 %v142
  %v681 = vunpack.c.l.b16 %v143
  %v682 = vunpack.c.l.b16 %v144
  %v683 = vunpack.c.l.b16 %v145
  %v684 = vunpack.c.l.b16 %v146
  %v685 = vunpack.c.l.b16 %v147
  %v686 = vunpack.c.l.b16 %v148
  %v687 = vunpack.c.l.b16 %v149
  %v688 = vunpack.c.l.b16 %v150
  %v689 = vunpack.c.l.b16 %v151
  %v690 = vunpack.c.l.b16 %v152
  %v691 = vunpack.c.l.b16 %v153
  %v692 = vunpack.c.l.b16 %v154
  %v693 = vunpack.c.l.b16 %v155
  %v694 = vunpack.c.l.b16 %v156
  %v695 = vunpack.c.l.b16 %v157
  %v696 = vunpack.c.l.b16 %v158
  %v697 = vunpack.c.l.b16 %v159
  %v698 = vunpack.c.l.b16 %v160
  %v699 = vunpack.c.l.b16 %v161
  %v700 = vunpack.c.l.b16 %v162
  %v701 = vunpack.c.l.b16 %v163
  %v702 = vunpack.c.l.b16 %v164
  %v703 = vunpack.c.l.b16 %v165
  %v704 = vunpack.c.l.b16 %v166
  %v705 = vunpack.c.l.b16 %v167
  %v706 = vunpack.c.l.b16 %v168
  %v707 = vunpack.c.l.b16 %v169
  %v708 = vunpack.c.l.b16 %v170
  %v709 = vunpack.c.l.b16 %v171
  %v710 = vunpack.c.l.b16 %v172
  %v711 = vunpack.c.l.b16 %v173
  %v712 = vunpack.c.l.b16 %v174
  %v713 = vunpack.c.l.b16 %v175
  %v714 = vunpack.c.l.b16 %v176
  %v715 = vunpack.c.l.b16 %v177
  %v716 = vunpack.c.l.b16 %v178
  %v717 = vunpack.c.l.b16 %v179
  %v718 = vunpack.c.l.b16 %v180
  %v719 = vunpack.c.l.b16 %v181
  %v720 = vunpack.c.l.b16 %v182
  %v721 = vunpack.c.l.b16 %v183
  %v722 = vunpack.c.l.b16 %v184
  %v723 = vunpack.c.l.b16 %v185
  %v724 = vunpack.c.l.b16 %v186
  %v725 = vunpack.c.l.b16 %v187
  %v726 = vunpack.c.l.b16 %v188
  %v727 = vunpack.c.l.b16 %v189
  %v728 = vunpack.c.l.b16 %v190
  %v729 = vunpack.c.l.b16 %v191
  %v730 = vunpack.c.l.b16 %v192
  %v731 = vunpack.c.l.b16 %v193
  %v732 = vunpack.c.l.b16 %v194
  %v733 = vunpack.c.l.b16 %v195
  %v734 = vunpack.c.l.b16 %v196
  %v735 = vunpack.c.l.b16 %v197
  %v736 = vunpack.c.l.b16 %v198
  %v737 = vunpack.c.l.b16 %v199
  %v738 = vunpack.c.l.b16 %v200
  %v739 = vunpack.c.l.b16 %v201
  %v740 = vunpack.c.l.b16 %v202
  %v741 = vunpack.c.l.b16 %v203
  %v742 = vunpack.c.l.b16 %v204
  %v743 = vunpack.c.l.b16 %v205
  %v744 = vunpack.c.l.b16 %v206
  %v745 = vunpack.c.l.b16 %v207
  %v746 = vunpack.c.l.b16 %v208
  %v747 = vunpack.c.l.b16 %v209
  %v748 = vunpack.c.l.b16 %v210
  %v749 = vunpack.c.l.b16 %v211
  %v750 = vunpack.c.l.b16 %v212
  %v751 = vunpack.c.l.b16 %v213
  %v752 = vunpack.c.l.b16 %v214
  %v753 = vunpack.c.l.b16 %v215
  %v754 = vunpack.c.l.b16 %v216
  %v755 = vunpack.c.l.b16 %v217
  %v756 = vunpack.c.l.b16 %v218
  %v757 = vunpack.c.l.b16 %v219
  %v758 = vunpack.c.l.b16 %v220
  %v759 = vunpack.c.l.b16 %v221
  %v760 = vunpack.c.l.b16 %v222
  %v761 = vunpack.c.l.b16 %v223
  %v762 = vunpack.c.l.b16 %v224
  %v763 = vunpack.c.l.b16 %v225
  %v764 = vunpack.c.l.b16 %v226
  %v765 = vunpack.c.l.b16 %v227
  %v766 = vunpack.c.l.b16 %v228
  %v767 = vunpack.c.l.b16 %v229
  %v768 = vunpack.c.l.b16 %v230
  %v769 = vunpack.c.l.b16 %v231
  %v770 = vunpack.c.l.b16 %v232
  %v771 = vunpack.c.l.b16 %v233
  %v772 = vunpack.c.l.b16 %v234
  %v773 = vunpack.c.l.b16 %v235
  %v774 = vunpack.c.l.b16 %v236
  %v775 = vunpack.c.l.b16 %v237
  %v776 = vunpack.c.l.b16 %v238
  %v777 = vunpack.c.l.b16 %v239
  %v778 = vunpack.c.l.b16 %v240
  %v779 = vunpack.c.l.b16 %v241
  %v780 = vunpack.c.l.b16 %v242
  %v781 = vunpack.c.l.b16 %v243
  %v782 = vunpack.c.l.b16 %v244
  %v783 = vunpack.c.l.b16 %v245
  %v784 = vunpack.c.l.b16 %v246
  %v785 = vunpack.c.l.b16 %v247
  %v786 = vunpack.c.l.b16 %v248
  %v787 = vunpack.c.l.b16 %v249
  %v788 = vunpack.c.l.b16 %v250
  %v789 = vunpack.c.l.b16 %v251
  %v790 = vunpack.c.l.b16 %v252
  %v791 = vunpack.c.l.b16 %v253
  %v792 = vunpack.c.l.b16 %v254
  %v793 = vunpack.c.l.b16 %v255
  %v794 = vunpack.c.l.b16 %v256
  %v795 = vunpack.c.l.b16 %v257
  %v796 = vunpack.c.l.b16 %v258
  %v797 = vunpack.c.l.b16 %v259
  %v798 = vunpack.c.l.b16 %v260
  %v799 = vunpack.c.l.b16 %v261
  %v800 = vunpack.c.l.b16 %v262
  %v801 = vunpack.c.l.b16 %v263
  %v802 = vunpack.c.l.b16 %v264
  %v803 = vunpack.c.l.b16 %v265
  %v804 = vunpack.c.l.b16 %v266
  %v805 = vunpack.c.l.b16 %v267
  %v806 = vunpack.c.l.b16 %v268
  %v807 = vunpack.c.l.b16 %v269
  %v808 = vunpack.c.l.b16 %v270
  %v809 = vunpack.c.l.b16 %v271
  %v810 = vunpack.c.l.b16 %v272
  %v811 = vunpack.c.l.b16 %v273
  %v812 = vpack.c.b16 %v557, %v556
  %v813 = vpack.c.b16 %v559, %v558
  %v814 = vpack.c.b16 %v561, %v560
  %v815 = vpack.c.b16 %v563, %v562
  %v816 = vpack.c.b16 %v565, %v564
  %v817 = vpack.c.b16 %v567, %v566
  %v818 = vpack.c.b16 %v569, %v568
  %v819 = vpack.c.b16 %v571, %v570
  %v820 = vpack.c.b16 %v573, %v572
  %v821 = vpack.c.b16 %v575, %v574
  %v822 = vpack.c.b16 %v577, %v576
  %v823 = vpack.c.b16 %v579, %v578
  %v824 = vpack.c.b16 %v581, %v580
  %v825 = vpack.c.b16 %v583, %v582
  %v826 = vpack.c.b16 %v585, %v584
  %v827 = vpack.c.b16 %v587, %v586
  %v828 = vpack.c.b16 %v589, %v588
  %v829 = vpack.c.b16 %v591, %v590
  %v830 = vpack.c.b16 %v593, %v592
  %v831 = vpack.c.b16 %v595, %v594
  %v832 = vpack.c.b16 %v597, %v596
  %v833 = vpack.c.b16 %v599, %v598
  %v834 = vpack.c.b16 %v601, %v600
  %v835 = vpack.c.b16 %v603, %v602
  %v836 = vpack.c.b16 %v605, %v604
  %v837 = vpack.c.b16 %v607, %v606
  %v838 = vpack.c.b16 %v609, %v608
  %v839 = vpack.c.b16 %v611, %v610
  %v840 = vpack.c.b16 %v613, %v612
  %v841 = vpack.c.b16 %v615, %v614
  %v842 = vpack.c.b16 %v617, %v616
  %v843 = vpack.c.b16 %v619, %v618
  %v844 = vpack.c.b16 %v621, %v620
  %v845 = vpack.c.b16 %v623, %v622
  %v846 = vpack.c.b16 %v625, %v624
  %v847 = vpack.c.b16 %v627, %v626
  %v848 = vpack.c.b16 %v629, %v628
  %v849 = vpack.c.b16 %v631, %v630
  %v850 = vpack.c.b16 %v633, %v632
  %v851 = vpack.c.b16 %v635, %v634
  %v852 = vpack.c.b16 %v637, %v636
  %v853 = vpack.c.b16 %v639, %v638
  %v854 = vpack.c.b16 %v641, %v640
  %v855 = vpack.c.b16 %v643, %v642
  %v856 = vpack.c.b16 %v645, %v644
  %v857 = vpack.c.b16 %v647, %v646
  %v858 = vpack.c.b16 %v649, %v648
  %v859 = vpack.c.b16 %v651, %v650
  %v860 = vpack.c.b16 %v653, %v652
  %v861 = vpack.c.b16 %v655, %v654
  %v862 = vpack.c.b16 %v657, %v656
  %v863 = vpack.c.b16 %v659, %v658
  %v864 = vpack.c.b16 %v661, %v660
  %v865 = vpack.c.b16 %v663, %v662
  %v866 = vpack.c.b16 %v665, %v664
  %v867 = vpack.c.b16 %v667, %v666
  %v868 = vpack.c.b16 %v669, %v668
  %v869 = vpack.c.b16 %v671, %v670
  %v870 = vpack.c.b16 %v673, %v672
  %v871 = vpack.c.b16 %v675, %v674
  %v872 = vpack.c.b16 %v677, %v676
  %v873 = vpack.c.b16 %v679, %v678
  %v874 = vpack.c.b16 %v681, %v680
  %v875 = vpack.c.b16 %v683, %v682
  %v876 = vpack.c.b16 %v685, %v684
  %v877 = vpack.c.b16 %v687, %v686
  %v878 = vpack.c.b16 %v689, %v688
  %v879 = vpack.c.b16 %v691, %v690
  %v880 = vpack.c.b16 %v693, %v692
  %v881 = vpack.c.b16 %v695, %v694
  %v882 = vpack.c.b16 %v697, %v696
  %v883 = vpack.c.b16 %v699, %v698
  %v884 = vpack.c.b16 %v701, %v700
  %v885 = vpack.c.b16 %v703, %v702
  %v886 = vpack.c.b16 %v705, %v704
  %v887 = vpack.c.b16 %v707, %v706
  %v888 = vpack.c.b16 %v709, %v708
  %v889 = vpack.c.b16 %v711, %v710
  %v890 = vpack.c.b16 %v713, %v712
  %v891 = vpack.c.b16 %v715, %v714
  %v892 = vpack.c.b16 %v717, %v716
  %v893 = vpack.c.b16 %v719, %v718
  %v894 = vpack.c.b16 %v721, %v720
  %v895 = vpack.c.b16 %v723, %v722
  %v896 = vpack.c.b16 %v725, %v724
  %v897 = vpack.c.b16 %v727, %v726
  %v898 = vpack.c.b16 %v729, %v728
  %v899 = vpack.c.b16 %v731, %v730
  %v900 = vpack.c.b16 %v733, %v732
  %v901 = vpack.c.b16 %v735, %v734
  %v902 = vpack.c.b16 %v737, %v736
  %v903 = vpack.c.b16 %v739, %v738
  %v904 = vpack.c.b16 %v741, %v740
  %v905 = vpack.c.b16 %v743, %v742
  %v906 = vpack.c.b16 %v745, %v744
  %v907 = vpack.c.b16 %v747, %v746
  %v908 = vpack.c.b16 %v749, %v748
  %v909 = vpack.c.b16 %v751, %v750
  %v910 = vpack.c.b16 %v753, %v752
  %v911 = vpack.c.b16 %v755, %v754
  %v912 = vpack.c.b16 %v757, %v756
  %v913 = vpack.c.b16 %v759, %v758
  %v914 = vpack.c.b16 %v761, %v760
  %v915 = vpack.c.b16 %v763, %v762
  %v916 = vpack.c.b16 %v765, %v764
  %v917 = vpack.c.b16 %v767, %v766
  %v918 = vpack.c.b16 %v769, %v768
  %v919 = vpack.c.b16 %v771, %v770
  %v920 = vpack.c.b16 %v773, %v772
  %v921 = vpack.c.b16 %v775, %v774
  %v922 = vpack.c.b16 %v777, %v776
  %v923 = vpack.c.b16 %v779, %v778
  %v924 = vpack.c.b16 %v781, %v780
  %v925 = vpack.c.b16 %v783, %v782
  %v926 = vpack.c.b16 %v785, %v784
  %v927 = vpack.c.b16 %v787, %v786
  %v928 = vpack.c.b16 %v789, %v788
  %v929 = vpack.c.b16 %v791, %v790
  %v930 = vpack.c.b16 %v793, %v792
  %v931 = vpack.c.b16 %v795, %v794
  %v932 = vpack.c.b16 %v797, %v796
  %v933 = vpack.c.b16 %v799, %v798
  %v934 = vpack.c.b16 %v801, %v800
  %v935 = vpack.c.b16 %v803, %v802
  %v936 = vpack.c.b16 %v805, %v804
  %v937 = vpack.c.b16 %v807, %v806
  %v938 = vpack.c.b16 %v809, %v808
  %v939 = vpack.c.b16 %v811, %v810
  %vm940 = vcmask 261120
  %v942 = vsel %vm940, %v298, 0
  %v945 = vsel %vm940, %v299, 0
  %v948 = vsel %vm940, %v812, 0
  %v951 = vsel %vm940, %v813, 0
  %v954 = vsel %vm940, %v814, 0
  %v957 = vsel %vm940, %v815, 0
  %v960 = vsel %vm940, %v816, 0
  %v963 = vsel %vm940, %v817, 0
  %v966 = vsel %vm940, %v818, 0
  %v969 = vsel %vm940, %v819, 0
  %v972 = vsel %vm940, %v820, 0
  %v975 = vsel %vm940, %v821, 0
  %v978 = vsel %vm940, %v822, 0
  %v981 = vsel %vm940, %v823, 0
  %v984 = vsel %vm940, %v824, 0
  %v987 = vsel %vm940, %v825, 0
  %v990 = vsel %vm940, %v826, 0
  %v993 = vsel %vm940, %v827, 0
  %v996 = vsel %vm940, %v828, 0
  %v999 = vsel %vm940, %v829, 0
  %v1002 = vsel %vm940, %v830, 0
  %v1005 = vsel %vm940, %v831, 0
  %v1008 = vsel %vm940, %v832, 0
  %v1011 = vsel %vm940, %v833, 0
  %v1014 = vsel %vm940, %v834, 0
  %v1017 = vsel %vm940, %v835, 0
  %v1020 = vsel %vm940, %v836, 0
  %v1023 = vsel %vm940, %v837, 0
  %v1026 = vsel %vm940, %v838, 0
  %v1029 = vsel %vm940, %v839, 0
  %v1032 = vsel %vm940, %v840, 0
  %v1035 = vsel %vm940, %v841, 0
  %v1038 = vsel %vm940, %v842, 0
  %v1041 = vsel %vm940, %v843, 0
  %v1044 = vsel %vm940, %v844, 0
  %v1047 = vsel %vm940, %v845, 0
  %v1050 = vsel %vm940, %v846, 0
  %v1053 = vsel %vm940, %v847, 0
  %v1056 = vsel %vm940, %v848, 0
  %v1059 = vsel %vm940, %v849, 0
  %v1062 = vsel %vm940, %v850, 0
  %v1065 = vsel %vm940, %v851, 0
  %v1068 = vsel %vm940, %v852, 0
  %v1071 = vsel %vm940, %v853, 0
  %v1074 = vsel %vm940, %v854, 0
  %v1077 = vsel %vm940, %v855, 0
  %v1080 = vsel %vm940, %v856, 0
  %v1083 = vsel %vm940, %v857, 0
  %v1086 = vsel %vm940, %v858, 0
  %v1089 = vsel %vm940, %v859, 0
  %v1092 = vsel %vm940, %v860, 0
  %v1095 = vsel %vm940, %v861, 0
  %v1098 = vsel %vm940, %v862, 0
  %v1101 = vsel %vm940, %v863, 0
  %v1104 = vsel %vm940, %v864, 0
  %v1107 = vsel %vm940, %v865, 0
  %v1110 = vsel %vm940, %v866, 0
  %v1113 = vsel %vm940, %v867, 0
  %v1116 = vsel %vm940, %v868, 0
  %v1119 = vsel %vm940, %v869, 0
  %v1122 = vsel %vm940, %v870, 0
  %v1125 = vsel %vm940, %v871, 0
  %v1128 = vsel %vm940, %v872, 0
  %v1131 = vsel %vm940, %v873, 0
  %v1134 = vsel %vm940, %v874, 0
  %v1137 = vsel %vm940, %v875, 0
  %v1140 = vsel %vm940, %v876, 0
  %v1143 = vsel %vm940, %v877, 0
  %v1146 = vsel %vm940, %v878, 0
  %v1149 = vsel %vm940, %v879, 0
  %v1152 = vsel %vm940, %v880, 0
  %v1155 = vsel %vm940, %v881, 0
  %v1158 = vsel %vm940, %v882, 0
  %v1161 = vsel %vm940, %v883, 0
  %v1164 = vsel %vm940, %v884, 0
  %v1167 = vsel %vm940, %v885, 0
  %v1170 = vsel %vm940, %v886, 0
  %v1173 = vsel %vm940, %v887, 0
  %v1176 = vsel %vm940, %v888, 0
  %v1179 = vsel %vm940, %v889, 0
  %v1182 = vsel %vm940, %v890, 0
  %v1185 = vsel %vm940, %v891, 0
  %v1188 = vsel %vm940, %v892, 0
  %v1191 = vsel %vm940, %v893, 0
  %v1194 = vsel %vm940, %v894, 0
  %v1197 = vsel %vm940, %v895, 0
  %v1200 = vsel %vm940, %v896, 0
  %v1203 = vsel %vm940, %v897, 0
  %v1206 = vsel %vm940, %v898, 0
  %v1209 = vsel %vm940, %v899, 0
  %v1212 = vsel %vm940, %v900, 0
  %v1215 = vsel %vm940, %v901, 0
  %v1218 = vsel %vm940, %v902, 0
  %v1221 = vsel %vm940, %v903, 0
  %v1224 = vsel %vm940, %v904, 0
  %v1227 = vsel %vm940, %v905, 0
  %v1230 = vsel %vm940, %v906, 0
  %v1233 = vsel %vm940, %v907, 0
  %v1236 = vsel %vm940, %v908, 0
  %v1239 = vsel %vm940, %v909, 0
  %v1242 = vsel %vm940, %v910, 0
  %v1245 = vsel %vm940, %v911, 0
  %v1248 = vsel %vm940, %v912, 0
  %v1251 = vsel %vm940, %v913, 0
  %v1254 = vsel %vm940, %v914, 0
  %v1257 = vsel %vm940, %v915, 0
  %v1260 = vsel %vm940, %v916, 0
  %v1263 = vsel %vm940, %v917, 0
  %v1266 = vsel %vm940, %v918, 0
  %v1269 = vsel %vm940, %v919, 0
  %v1272 = vsel %vm940, %v920, 0
  %v1275 = vsel %vm940, %v921, 0
  %v1278 = vsel %vm940, %v922, 0
  %v1281 = vsel %vm940, %v923, 0
  %v1284 = vsel %vm940, %v924, 0
  %v1287 = vsel %vm940, %v925, 0
  %v1290 = vsel %vm940, %v926, 0
  %v1293 = vsel %vm940, %v927, 0
  %v1296 = vsel %vm940, %v928, 0
  %v1299 = vsel %vm940, %v929, 0
  %v1302 = vsel %vm940, %v930, 0
  %v1305 = vsel %vm940, %v931, 0
  %v1308 = vsel %vm940, %v932, 0
  %v1311 = vsel %vm940, %v933, 0
  %v1314 = vsel %vm940, %v934, 0
  %v1317 = vsel %vm940, %v935, 0
  %v1320 = vsel %vm940, %v936, 0
  %v1323 = vsel %vm940, %v937, 0
  %v1326 = vsel %vm940, %v938, 0
  %v1329 = vsel %vm940, %v939, 0
  %1331 = vmatprep.subr.bf16.mxu0 0
  %1332 = vmatpush1.bf16.xpose.msra.mxu0 %v969
  %1333 = vmatprep.subr.bf16.mxu0 0
  %1334 = vmatpush1.bf16.xpose.msra.mxu0 %v966
  %1335 = vmatprep.subr.bf16.mxu0 0
  %1336 = vmatpush1.bf16.xpose.msra.mxu0 %v963
  %1337 = vmatprep.subr.bf16.mxu0 0
  %1338 = vmatpush1.bf16.xpose.msra.mxu0 %v960
  %1339 = vmatprep.subr.bf16.mxu0 0
  %1340 = vmatpush1.bf16.xpose.msra.mxu0 %v957
  %1341 = vmatprep.subr.bf16.mxu0 0
  %1342 = vmatpush1.bf16.xpose.msra.mxu0 %v954
  %1343 = vmatprep.subr.bf16.mxu0 0
  %1344 = vmatpush1.bf16.xpose.msra.mxu0 %v951
  %1345 = vmatprep.subr.bf16.mxu0 0
  %1346 = vmatpush1.bf16.xpose.msra.mxu0 %v948
  %1347 = vmatprep.subr.bf16.mxu0 0
  %1348 = vmatpush2.bf16.xpose.msra.mxu0 %v993
  %1349 = vmatprep.subr.bf16.mxu0 0
  %1350 = vmatpush2.bf16.xpose.msra.mxu0 %v990
  %1351 = vmatprep.subr.bf16.mxu0 0
  %1352 = vmatpush2.bf16.xpose.msra.mxu0 %v987
  %1353 = vmatprep.subr.bf16.mxu0 0
  %1354 = vmatpush2.bf16.xpose.msra.mxu0 %v984
  %1355 = vmatprep.subr.bf16.mxu0 0
  %1356 = vmatpush2.bf16.xpose.msra.mxu0 %v981
  %1357 = vmatprep.subr.bf16.mxu0 0
  %1358 = vmatpush2.bf16.xpose.msra.mxu0 %v978
  %1359 = vmatprep.subr.bf16.mxu0 0
  %1360 = vmatpush2.bf16.xpose.msra.mxu0 %v975
  %1361 = vmatprep.subr.bf16.mxu0 0
  %1362 = vmatpush2.bf16.xpose.msra.mxu0 %v972
  %1363 = vmatprep.mubr.bf16.mxu0 0
  %1364 = vmatmul.mubr.bf16.gmra.mxu0 %v942
  %v1365 = vpop.f32.mrf.mxu0
  %v1366 = vadd.f32 %v280, %v1365
  %v1367 = vpop.f32.mrf.mxu0
  %v1368 = vadd.f32 %v280, %v1367
  %v1369 = vpop.f32.mrf.mxu0
  %v1370 = vadd.f32 %v285, %v1369
  %v1371 = vpop.f32.mrf.mxu0
  %v1372 = vadd.f32 %v285, %v1371
  %1373 = vmatprep.mubr.bf16.mxu0 0
  %1374 = vmatmul.mubr.bf16.gmra.mxu0 %v945
  %v1375 = vpop.f32.mrf.mxu0
  %v1376 = vadd.f32 %v290, %v1375
  %v1377 = vpop.f32.mrf.mxu0
  %v1378 = vadd.f32 %v290, %v1377
  %v1379 = vpop.f32.mrf.mxu0
  %v1380 = vpop.f32.mrf.mxu0
  %1381 = vdwg.mxu0
  %1382 = vmatprep.subr.bf16.mxu0 0
  %1383 = vmatpush1.bf16.xpose.msra.mxu0 %v1017
  %1384 = vmatprep.subr.bf16.mxu0 0
  %1385 = vmatpush1.bf16.xpose.msra.mxu0 %v1014
  %1386 = vmatprep.subr.bf16.mxu0 0
  %1387 = vmatpush1.bf16.xpose.msra.mxu0 %v1011
  %1388 = vmatprep.subr.bf16.mxu0 0
  %1389 = vmatpush1.bf16.xpose.msra.mxu0 %v1008
  %1390 = vmatprep.subr.bf16.mxu0 0
  %1391 = vmatpush1.bf16.xpose.msra.mxu0 %v1005
  %1392 = vmatprep.subr.bf16.mxu0 0
  %1393 = vmatpush1.bf16.xpose.msra.mxu0 %v1002
  %1394 = vmatprep.subr.bf16.mxu0 0
  %1395 = vmatpush1.bf16.xpose.msra.mxu0 %v999
  %1396 = vmatprep.subr.bf16.mxu0 0
  %1397 = vmatpush1.bf16.xpose.msra.mxu0 %v996
  %1398 = vmatprep.subr.bf16.mxu0 0
  %1399 = vmatpush2.bf16.xpose.msra.mxu0 %v1041
  %1400 = vmatprep.subr.bf16.mxu0 0
  %1401 = vmatpush2.bf16.xpose.msra.mxu0 %v1038
  %1402 = vmatprep.subr.bf16.mxu0 0
  %1403 = vmatpush2.bf16.xpose.msra.mxu0 %v1035
  %1404 = vmatprep.subr.bf16.mxu0 0
  %1405 = vmatpush2.bf16.xpose.msra.mxu0 %v1032
  %1406 = vmatprep.subr.bf16.mxu0 0
  %1407 = vmatpush2.bf16.xpose.msra.mxu0 %v1029
  %1408 = vmatprep.subr.bf16.mxu0 0
  %1409 = vmatpush2.bf16.xpose.msra.mxu0 %v1026
  %1410 = vmatprep.subr.bf16.mxu0 0
  %1411 = vmatpush2.bf16.xpose.msra.mxu0 %v1023
  %1412 = vmatprep.subr.bf16.mxu0 0
  %1413 = vmatpush2.bf16.xpose.msra.mxu0 %v1020
  %1414 = vmatprep.mubr.bf16.mxu0 0
  %1415 = vmatmul.mubr.bf16.gmra.mxu0 %v942
  %v1416 = vpop.f32.mrf.mxu0
  %v1417 = vadd.f32 %v280, %v1416
  %v1418 = vpop.f32.mrf.mxu0
  %v1419 = vadd.f32 %v280, %v1418
  %v1420 = vpop.f32.mrf.mxu0
  %v1421 = vadd.f32 %v285, %v1420
  %v1422 = vpop.f32.mrf.mxu0
  %v1423 = vadd.f32 %v285, %v1422
  %1424 = vmatprep.mubr.bf16.mxu0 0
  %1425 = vmatmul.mubr.bf16.gmra.mxu0 %v945
  %v1426 = vpop.f32.mrf.mxu0
  %v1427 = vadd.f32 %v290, %v1426
  %v1428 = vpop.f32.mrf.mxu0
  %v1429 = vadd.f32 %v290, %v1428
  %v1430 = vpop.f32.mrf.mxu0
  %v1431 = vpop.f32.mrf.mxu0
  %1432 = vdwg.mxu0
  %1433 = vmatprep.subr.bf16.mxu0 0
  %1434 = vmatpush1.bf16.xpose.msra.mxu0 %v1065
  %1435 = vmatprep.subr.bf16.mxu0 0
  %1436 = vmatpush1.bf16.xpose.msra.mxu0 %v1062
  %1437 = vmatprep.subr.bf16.mxu0 0
  %1438 = vmatpush1.bf16.xpose.msra.mxu0 %v1059
  %1439 = vmatprep.subr.bf16.mxu0 0
  %1440 = vmatpush1.bf16.xpose.msra.mxu0 %v1056
  %1441 = vmatprep.subr.bf16.mxu0 0
  %1442 = vmatpush1.bf16.xpose.msra.mxu0 %v1053
  %1443 = vmatprep.subr.bf16.mxu0 0
  %1444 = vmatpush1.bf16.xpose.msra.mxu0 %v1050
  %1445 = vmatprep.subr.bf16.mxu0 0
  %1446 = vmatpush1.bf16.xpose.msra.mxu0 %v1047
  %1447 = vmatprep.subr.bf16.mxu0 0
  %1448 = vmatpush1.bf16.xpose.msra.mxu0 %v1044
  %1449 = vmatprep.subr.bf16.mxu0 0
  %1450 = vmatpush2.bf16.xpose.msra.mxu0 %v1089
  %1451 = vmatprep.subr.bf16.mxu0 0
  %1452 = vmatpush2.bf16.xpose.msra.mxu0 %v1086
  %1453 = vmatprep.subr.bf16.mxu0 0
  %1454 = vmatpush2.bf16.xpose.msra.mxu0 %v1083
  %1455 = vmatprep.subr.bf16.mxu0 0
  %1456 = vmatpush2.bf16.xpose.msra.mxu0 %v1080
  %1457 = vmatprep.subr.bf16.mxu0 0
  %1458 = vmatpush2.bf16.xpose.msra.mxu0 %v1077
  %1459 = vmatprep.subr.bf16.mxu0 0
  %1460 = vmatpush2.bf16.xpose.msra.mxu0 %v1074
  %1461 = vmatprep.subr.bf16.mxu0 0
  %1462 = vmatpush2.bf16.xpose.msra.mxu0 %v1071
  %1463 = vmatprep.subr.bf16.mxu0 0
  %1464 = vmatpush2.bf16.xpose.msra.mxu0 %v1068
  %1465 = vmatprep.mubr.bf16.mxu0 0
  %1466 = vmatmul.mubr.bf16.gmra.mxu0 %v942
  %v1467 = vpop.f32.mrf.mxu0
  %v1468 = vadd.f32 %v280, %v1467
  %v1469 = vpop.f32.mrf.mxu0
  %v1470 = vadd.f32 %v280, %v1469
  %v1471 = vpop.f32.mrf.mxu0
  %v1472 = vadd.f32 %v285, %v1471
  %v1473 = vpop.f32.mrf.mxu0
  %v1474 = vadd.f32 %v285, %v1473
  %1475 = vmatprep.mubr.bf16.mxu0 0
  %1476 = vmatmul.mubr.bf16.gmra.mxu0 %v945
  %v1477 = vpop.f32.mrf.mxu0
  %v1478 = vadd.f32 %v290, %v1477
  %v1479 = vpop.f32.mrf.mxu0
  %v1480 = vadd.f32 %v290, %v1479
  %v1481 = vpop.f32.mrf.mxu0
  %v1482 = vpop.f32.mrf.mxu0
  %1483 = vdwg.mxu0
  %1484 = vmatprep.subr.bf16.mxu0 0
  %1485 = vmatpush1.bf16.xpose.msra.mxu0 %v1113
  %1486 = vmatprep.subr.bf16.mxu0 0
  %1487 = vmatpush1.bf16.xpose.msra.mxu0 %v1110
  %1488 = vmatprep.subr.bf16.mxu0 0
  %1489 = vmatpush1.bf16.xpose.msra.mxu0 %v1107
  %1490 = vmatprep.subr.bf16.mxu0 0
  %1491 = vmatpush1.bf16.xpose.msra.mxu0 %v1104
  %1492 = vmatprep.subr.bf16.mxu0 0
  %1493 = vmatpush1.bf16.xpose.msra.mxu0 %v1101
  %1494 = vmatprep.subr.bf16.mxu0 0
  %1495 = vmatpush1.bf16.xpose.msra.mxu0 %v1098
  %1496 = vmatprep.subr.bf16.mxu0 0
  %1497 = vmatpush1.bf16.xpose.msra.mxu0 %v1095
  %1498 = vmatprep.subr.bf16.mxu0 0
  %1499 = vmatpush1.bf16.xpose.msra.mxu0 %v1092
  %1500 = vmatprep.subr.bf16.mxu0 0
  %1501 = vmatpush2.bf16.xpose.msra.mxu0 %v1137
  %1502 = vmatprep.subr.bf16.mxu0 0
  %1503 = vmatpush2.bf16.xpose.msra.mxu0 %v1134
  %1504 = vmatprep.subr.bf16.mxu0 0
  %1505 = vmatpush2.bf16.xpose.msra.mxu0 %v1131
  %1506 = vmatprep.subr.bf16.mxu0 0
  %1507 = vmatpush2.bf16.xpose.msra.mxu0 %v1128
  %1508 = vmatprep.subr.bf16.mxu0 0
  %1509 = vmatpush2.bf16.xpose.msra.mxu0 %v1125
  %1510 = vmatprep.subr.bf16.mxu0 0
  %1511 = vmatpush2.bf16.xpose.msra.mxu0 %v1122
  %1512 = vmatprep.subr.bf16.mxu0 0
  %1513 = vmatpush2.bf16.xpose.msra.mxu0 %v1119
  %1514 = vmatprep.subr.bf16.mxu0 0
  %1515 = vmatpush2.bf16.xpose.msra.mxu0 %v1116
  %1516 = vmatprep.mubr.bf16.mxu0 0
  %1517 = vmatmul.mubr.bf16.gmra.mxu0 %v942
  %v1518 = vpop.f32.mrf.mxu0
  %v1519 = vadd.f32 %v280, %v1518
  %v1520 = vpop.f32.mrf.mxu0
  %v1521 = vadd.f32 %v280, %v1520
  %v1522 = vpop.f32.mrf.mxu0
  %v1523 = vadd.f32 %v285, %v1522
  %v1524 = vpop.f32.mrf.mxu0
  %v1525 = vadd.f32 %v285, %v1524
  %1526 = vmatprep.mubr.bf16.mxu0 0
  %1527 = vmatmul.mubr.bf16.gmra.mxu0 %v945
  %v1528 = vpop.f32.mrf.mxu0
  %v1529 = vadd.f32 %v290, %v1528
  %v1530 = vpop.f32.mrf.mxu0
  %v1531 = vadd.f32 %v290, %v1530
  %v1532 = vpop.f32.mrf.mxu0
  %v1533 = vpop.f32.mrf.mxu0
  %1534 = vdwg.mxu0
  %1535 = vmatprep.subr.bf16.mxu0 0
  %1536 = vmatpush1.bf16.xpose.msra.mxu0 %v1161
  %1537 = vmatprep.subr.bf16.mxu0 0
  %1538 = vmatpush1.bf16.xpose.msra.mxu0 %v1158
  %1539 = vmatprep.subr.bf16.mxu0 0
  %1540 = vmatpush1.bf16.xpose.msra.mxu0 %v1155
  %1541 = vmatprep.subr.bf16.mxu0 0
  %1542 = vmatpush1.bf16.xpose.msra.mxu0 %v1152
  %1543 = vmatprep.subr.bf16.mxu0 0
  %1544 = vmatpush1.bf16.xpose.msra.mxu0 %v1149
  %1545 = vmatprep.subr.bf16.mxu0 0
  %1546 = vmatpush1.bf16.xpose.msra.mxu0 %v1146
  %1547 = vmatprep.subr.bf16.mxu0 0
  %1548 = vmatpush1.bf16.xpose.msra.mxu0 %v1143
  %1549 = vmatprep.subr.bf16.mxu0 0
  %1550 = vmatpush1.bf16.xpose.msra.mxu0 %v1140
  %1551 = vmatprep.subr.bf16.mxu0 0
  %1552 = vmatpush2.bf16.xpose.msra.mxu0 %v1185
  %1553 = vmatprep.subr.bf16.mxu0 0
  %1554 = vmatpush2.bf16.xpose.msra.mxu0 %v1182
  %1555 = vmatprep.subr.bf16.mxu0 0
  %1556 = vmatpush2.bf16.xpose.msra.mxu0 %v1179
  %1557 = vmatprep.subr.bf16.mxu0 0
  %1558 = vmatpush2.bf16.xpose.msra.mxu0 %v1176
  %1559 = vmatprep.subr.bf16.mxu0 0
  %1560 = vmatpush2.bf16.xpose.msra.mxu0 %v1173
  %1561 = vmatprep.subr.bf16.mxu0 0
  %1562 = vmatpush2.bf16.xpose.msra.mxu0 %v1170
  %1563 = vmatprep.subr.bf16.mxu0 0
  %1564 = vmatpush2.bf16.xpose.msra.mxu0 %v1167
  %1565 = vmatprep.subr.bf16.mxu0 0
  %1566 = vmatpush2.bf16.xpose.msra.mxu0 %v1164
  %1567 = vmatprep.mubr.bf16.mxu0 0
  %1568 = vmatmul.mubr.bf16.gmra.mxu0 %v942
  %v1569 = vpop.f32.mrf.mxu0
  %v1570 = vadd.f32 %v280, %v1569
  %v1571 = vpop.f32.mrf.mxu0
  %v1572 = vadd.f32 %v280, %v1571
  %v1573 = vpop.f32.mrf.mxu0
  %v1574 = vadd.f32 %v285, %v1573
  %v1575 = vpop.f32.mrf.mxu0
  %v1576 = vadd.f32 %v285, %v1575
  %1577 = vmatprep.mubr.bf16.mxu0 0
  %1578 = vmatmul.mubr.bf16.gmra.mxu0 %v945
  %v1579 = vpop.f32.mrf.mxu0
  %v1580 = vadd.f32 %v290, %v1579
  %v1581 = vpop.f32.mrf.mxu0
  %v1582 = vadd.f32 %v290, %v1581
  %v1583 = vpop.f32.mrf.mxu0
  %v1584 = vpop.f32.mrf.mxu0
  %1585 = vdwg.mxu0
  %1586 = vmatprep.subr.bf16.mxu0 0
  %1587 = vmatpush1.bf16.xpose.msra.mxu0 %v1209
  %1588 = vmatprep.subr.bf16.mxu0 0
  %1589 = vmatpush1.bf16.xpose.msra.mxu0 %v1206
  %1590 = vmatprep.subr.bf16.mxu0 0
  %1591 = vmatpush1.bf16.xpose.msra.mxu0 %v1203
  %1592 = vmatprep.subr.bf16.mxu0 0
  %1593 = vmatpush1.bf16.xpose.msra.mxu0 %v1200
  %1594 = vmatprep.subr.bf16.mxu0 0
  %1595 = vmatpush1.bf16.xpose.msra.mxu0 %v1197
  %1596 = vmatprep.subr.bf16.mxu0 0
  %1597 = vmatpush1.bf16.xpose.msra.mxu0 %v1194
  %1598 = vmatprep.subr.bf16.mxu0 0
  %1599 = vmatpush1.bf16.xpose.msra.mxu0 %v1191
  %1600 = vmatprep.subr.bf16.mxu0 0
  %1601 = vmatpush1.bf16.xpose.msra.mxu0 %v1188
  %1602 = vmatprep.subr.bf16.mxu0 0
  %1603 = vmatpush2.bf16.xpose.msra.mxu0 %v1233
  %1604 = vmatprep.subr.bf16.mxu0 0
  %1605 = vmatpush2.bf16.xpose.msra.mxu0 %v1230
  %1606 = vmatprep.subr.bf16.mxu0 0
  %1607 = vmatpush2.bf16.xpose.msra.mxu0 %v1227
  %1608 = vmatprep.subr.bf16.mxu0 0
  %1609 = vmatpush2.bf16.xpose.msra.mxu0 %v1224
  %1610 = vmatprep.subr.bf16.mxu0 0
  %1611 = vmatpush2.bf16.xpose.msra.mxu0 %v1221
  %1612 = vmatprep.subr.bf16.mxu0 0
  %1613 = vmatpush2.bf16.xpose.msra.mxu0 %v1218
  %1614 = vmatprep.subr.bf16.mxu0 0
  %1615 = vmatpush2.bf16.xpose.msra.mxu0 %v1215
  %1616 = vmatprep.subr.bf16.mxu0 0
  %1617 = vmatpush2.bf16.xpose.msra.mxu0 %v1212
  %1618 = vmatprep.mubr.bf16.mxu0 0
  %1619 = vmatmul.mubr.bf16.gmra.mxu0 %v942
  %v1620 = vpop.f32.mrf.mxu0
  %v1621 = vadd.f32 %v280, %v1620
  %v1622 = vpop.f32.mrf.mxu0
  %v1623 = vadd.f32 %v280, %v1622
  %v1624 = vpop.f32.mrf.mxu0
  %v1625 = vadd.f32 %v285, %v1624
  %v1626 = vpop.f32.mrf.mxu0
  %v1627 = vadd.f32 %v285, %v1626
  %1628 = vmatprep.mubr.bf16.mxu0 0
  %1629 = vmatmul.mubr.bf16.gmra.mxu0 %v945
  %v1630 = vpop.f32.mrf.mxu0
  %v1631 = vadd.f32 %v290, %v1630
  %v1632 = vpop.f32.mrf.mxu0
  %v1633 = vadd.f32 %v290, %v1632
  %v1634 = vpop.f32.mrf.mxu0
  %v1635 = vpop.f32.mrf.mxu0
  %1636 = vdwg.mxu0
  %1637 = vmatprep.subr.bf16.mxu0 0
  %1638 = vmatpush1.bf16.xpose.msra.mxu0 %v1257
  %1639 = vmatprep.subr.bf16.mxu0 0
  %1640 = vmatpush1.bf16.xpose.msra.mxu0 %v1254
  %1641 = vmatprep.subr.bf16.mxu0 0
  %1642 = vmatpush1.bf16.xpose.msra.mxu0 %v1251
  %1643 = vmatprep.subr.bf16.mxu0 0
  %1644 = vmatpush1.bf16.xpose.msra.mxu0 %v1248
  %1645 = vmatprep.subr.bf16.mxu0 0
  %1646 = vmatpush1.bf16.xpose.msra.mxu0 %v1245
  %1647 = vmatprep.subr.bf16.mxu0 0
  %1648 = vmatpush1.bf16.xpose.msra.mxu0 %v1242
  %1649 = vmatprep.subr.bf16.mxu0 0
  %1650 = vmatpush1.bf16.xpose.msra.mxu0 %v1239
  %1651 = vmatprep.subr.bf16.mxu0 0
  %1652 = vmatpush1.bf16.xpose.msra.mxu0 %v1236
  %1653 = vmatprep.subr.bf16.mxu0 0
  %1654 = vmatpush2.bf16.xpose.msra.mxu0 %v1281
  %1655 = vmatprep.subr.bf16.mxu0 0
  %1656 = vmatpush2.bf16.xpose.msra.mxu0 %v1278
  %1657 = vmatprep.subr.bf16.mxu0 0
  %1658 = vmatpush2.bf16.xpose.msra.mxu0 %v1275
  %1659 = vmatprep.subr.bf16.mxu0 0
  %1660 = vmatpush2.bf16.xpose.msra.mxu0 %v1272
  %1661 = vmatprep.subr.bf16.mxu0 0
  %1662 = vmatpush2.bf16.xpose.msra.mxu0 %v1269
  %1663 = vmatprep.subr.bf16.mxu0 0
  %1664 = vmatpush2.bf16.xpose.msra.mxu0 %v1266
  %1665 = vmatprep.subr.bf16.mxu0 0
  %1666 = vmatpush2.bf16.xpose.msra.mxu0 %v1263
  %1667 = vmatprep.subr.bf16.mxu0 0
  %1668 = vmatpush2.bf16.xpose.msra.mxu0 %v1260
  %1669 = vmatprep.mubr.bf16.mxu0 0
  %1670 = vmatmul.mubr.bf16.gmra.mxu0 %v942
  %v1671 = vpop.f32.mrf.mxu0
  %v1672 = vadd.f32 %v280, %v1671
  %v1673 = vpop.f32.mrf.mxu0
  %v1674 = vadd.f32 %v280, %v1673
  %v1675 = vpop.f32.mrf.mxu0
  %v1676 = vadd.f32 %v285, %v1675
  %v1677 = vpop.f32.mrf.mxu0
  %v1678 = vadd.f32 %v285, %v1677
  %1679 = vmatprep.mubr.bf16.mxu0 0
  %1680 = vmatmul.mubr.bf16.gmra.mxu0 %v945
  %v1681 = vpop.f32.mrf.mxu0
  %v1682 = vadd.f32 %v290, %v1681
  %v1683 = vpop.f32.mrf.mxu0
  %v1684 = vadd.f32 %v290, %v1683
  %v1685 = vpop.f32.mrf.mxu0
  %v1686 = vpop.f32.mrf.mxu0
  %1687 = vdwg.mxu0
  %1688 = vmatprep.subr.bf16.mxu0 0
  %1689 = vmatpush1.bf16.xpose.msra.mxu0 %v1305
  %1690 = vmatprep.subr.bf16.mxu0 0
  %1691 = vmatpush1.bf16.xpose.msra.mxu0 %v1302
  %1692 = vmatprep.subr.bf16.mxu0 0
  %1693 = vmatpush1.bf16.xpose.msra.mxu0 %v1299
  %1694 = vmatprep.subr.bf16.mxu0 0
  %1695 = vmatpush1.bf16.xpose.msra.mxu0 %v1296
  %1696 = vmatprep.subr.bf16.mxu0 0
  %1697 = vmatpush1.bf16.xpose.msra.mxu0 %v1293
  %1698 = vmatprep.subr.bf16.mxu0 0
  %1699 = vmatpush1.bf16.xpose.msra.mxu0 %v1290
  %1700 = vmatprep.subr.bf16.mxu0 0
  %1701 = vmatpush1.bf16.xpose.msra.mxu0 %v1287
  %1702 = vmatprep.subr.bf16.mxu0 0
  %1703 = vmatpush1.bf16.xpose.msra.mxu0 %v1284
  %1704 = vmatprep.subr.bf16.mxu0 0
  %1705 = vmatpush2.bf16.xpose.msra.mxu0 %v1329
  %1706 = vmatprep.subr.bf16.mxu0 0
  %1707 = vmatpush2.bf16.xpose.msra.mxu0 %v1326
  %1708 = vmatprep.subr.bf16.mxu0 0
  %1709 = vmatpush2.bf16.xpose.msra.mxu0 %v1323
  %1710 = vmatprep.subr.bf16.mxu0 0
  %1711 = vmatpush2.bf16.xpose.msra.mxu0 %v1320
  %1712 = vmatprep.subr.bf16.mxu0 0
  %1713 = vmatpush2.bf16.xpose.msra.mxu0 %v1317
  %1714 = vmatprep.subr.bf16.mxu0 0
  %1715 = vmatpush2.bf16.xpose.msra.mxu0 %v1314
  %1716 = vmatprep.subr.bf16.mxu0 0
  %1717 = vmatpush2.bf16.xpose.msra.mxu0 %v1311
  %1718 = vmatprep.subr.bf16.mxu0 0
  %1719 = vmatpush2.bf16.xpose.msra.mxu0 %v1308
  %1720 = vmatprep.mubr.bf16.mxu0 0
  %1721 = vmatmul.mubr.bf16.gmra.mxu0 %v942
  %v1722 = vpop.f32.mrf.mxu0
  %v1723 = vadd.f32 %v280, %v1722
  %v1724 = vpop.f32.mrf.mxu0
  %v1725 = vadd.f32 %v280, %v1724
  %v1726 = vpop.f32.mrf.mxu0
  %v1727 = vadd.f32 %v285, %v1726
  %v1728 = vpop.f32.mrf.mxu0
  %v1729 = vadd.f32 %v285, %v1728
  %1730 = vmatprep.mubr.bf16.mxu0 0
  %1731 = vmatmul.mubr.bf16.gmra.mxu0 %v945
  %v1732 = vpop.f32.mrf.mxu0
  %v1733 = vadd.f32 %v290, %v1732
  %v1734 = vpop.f32.mrf.mxu0
  %v1735 = vadd.f32 %v290, %v1734
  %v1736 = vpop.f32.mrf.mxu0
  %v1737 = vpop.f32.mrf.mxu0
  %1738 = vdwg.mxu0
  %v1739 = vmax.f32 %v1366, 0.0
  %v1740 = vmax.f32 %v1368, 0.0
  %v1741 = vmax.f32 %v1417, 0.0
  %v1742 = vmax.f32 %v1419, 0.0
  %v1743 = vmax.f32 %v1468, 0.0
  %v1744 = vmax.f32 %v1470, 0.0
  %v1745 = vmax.f32 %v1519, 0.0
  %v1746 = vmax.f32 %v1521, 0.0
  %v1747 = vmax.f32 %v1570, 0.0
  %v1748 = vmax.f32 %v1572, 0.0
  %v1749 = vmax.f32 %v1621, 0.0
  %v1750 = vmax.f32 %v1623, 0.0
  %v1751 = vmax.f32 %v1672, 0.0
  %v1752 = vmax.f32 %v1674, 0.0
  %v1753 = vmax.f32 %v1723, 0.0
  %v1754 = vmax.f32 %v1725, 0.0
  %v1755 = vmax.f32 %v1370, 0.0
  %v1756 = vmax.f32 %v1372, 0.0
  %v1757 = vmax.f32 %v1421, 0.0
  %v1758 = vmax.f32 %v1423, 0.0
  %v1759 = vmax.f32 %v1472, 0.0
  %v1760 = vmax.f32 %v1474, 0.0
  %v1761 = vmax.f32 %v1523, 0.0
  %v1762 = vmax.f32 %v1525, 0.0
  %v1763 = vmax.f32 %v1574, 0.0
  %v1764 = vmax.f32 %v1576, 0.0
  %v1765 = vmax.f32 %v1625, 0.0
  %v1766 = vmax.f32 %v1627, 0.0
  %v1767 = vmax.f32 %v1676, 0.0
  %v1768 = vmax.f32 %v1678, 0.0
  %v1769 = vmax.f32 %v1727, 0.0
  %v1770 = vmax.f32 %v1729, 0.0
  %v1771 = vmax.f32 %v1376, 0.0
  %v1772 = vmax.f32 %v1378, 0.0
  %v1773 = vmax.f32 %v1427, 0.0
  %v1774 = vmax.f32 %v1429, 0.0
  %v1775 = vmax.f32 %v1478, 0.0
  %v1776 = vmax.f32 %v1480, 0.0
  %v1777 = vmax.f32 %v1529, 0.0
  %v1778 = vmax.f32 %v1531, 0.0
  %v1779 = vmax.f32 %v1580, 0.0
  %v1780 = vmax.f32 %v1582, 0.0
  %v1781 = vmax.f32 %v1631, 0.0
  %v1782 = vmax.f32 %v1633, 0.0
  %v1783 = vmax.f32 %v1682, 0.0
  %v1784 = vmax.f32 %v1684, 0.0
  %v1785 = vmax.f32 %v1733, 0.0
  %v1786 = vmax.f32 %v1735, 0.0
  %v1787 = vadd.f32 %v1739, %v1740
  %v1788 = vadd.f32 %v1787, %v1741
  %v1789 = vadd.f32 %v1788, %v1742
  %v1790 = vadd.f32 %v1789, %v1743
  %v1791 = vadd.f32 %v1790, %v1744
  %v1792 = vadd.f32 %v1791, %v1745
  %v1793 = vadd.f32 %v1792, %v1746
  %v1794 = vadd.f32 %v1793, %v1747
  %v1795 = vadd.f32 %v1794, %v1748
  %v1796 = vadd.f32 %v1795, %v1749
  %v1797 = vadd.f32 %v1796, %v1750
  %v1798 = vadd.f32 %v1797, %v1751
  %v1799 = vadd.f32 %v1798, %v1752
  %v1800 = vadd.f32 %v1799, %v1753
  %v1801 = vadd.f32 %v1800, %v1754
  %1802 = vadd.xlane.f32.xlu0 %v1801
  %v1803 = vpop.xlane.xlu0 %1802
  %v1804 = vadd.f32 %v1755, %v1756
  %v1805 = vadd.f32 %v1804, %v1757
  %v1806 = vadd.f32 %v1805, %v1758
  %v1807 = vadd.f32 %v1806, %v1759
  %v1808 = vadd.f32 %v1807, %v1760
  %v1809 = vadd.f32 %v1808, %v1761
  %v1810 = vadd.f32 %v1809, %v1762
  %v1811 = vadd.f32 %v1810, %v1763
  %v1812 = vadd.f32 %v1811, %v1764
  %v1813 = vadd.f32 %v1812, %v1765
  %v1814 = vadd.f32 %v1813, %v1766
  %v1815 = vadd.f32 %v1814, %v1767
  %v1816 = vadd.f32 %v1815, %v1768
  %v1817 = vadd.f32 %v1816, %v1769
  %v1818 = vadd.f32 %v1817, %v1770
  %1819 = vadd.xlane.f32.xlu0 %v1818
  %v1820 = vpop.xlane.xlu0 %1819
  %v1821 = vadd.f32 %v1771, %v1772
  %v1822 = vadd.f32 %v1821, %v1773
  %v1823 = vadd.f32 %v1822, %v1774
  %v1824 = vadd.f32 %v1823, %v1775
  %v1825 = vadd.f32 %v1824, %v1776
  %v1826 = vadd.f32 %v1825, %v1777
  %v1827 = vadd.f32 %v1826, %v1778
  %v1828 = vadd.f32 %v1827, %v1779
  %v1829 = vadd.f32 %v1828, %v1780
  %v1830 = vadd.f32 %v1829, %v1781
  %v1831 = vadd.f32 %v1830, %v1782
  %v1832 = vadd.f32 %v1831, %v1783
  %v1833 = vadd.f32 %v1832, %v1784
  %v1834 = vadd.f32 %v1833, %v1785
  %v1835 = vadd.f32 %v1834, %v1786
  %1836 = vadd.xlane.f32.xlu0 %v1835
  %v1837 = vpop.xlane.xlu0 %1836
  %v1838 = vrcp.pop 2048.0
  %v1839 = vmul.f32 %v1803, %v1838
  %v1840 = vmul.f32 %v1820, %v1838
  %v1841 = vmul.f32 %v1837, %v1838
  %v1842 = vsub.f32 %v1739, %v1839
  %v1843 = vsub.f32 %v1740, %v1839
  %v1844 = vsub.f32 %v1741, %v1839
  %v1845 = vsub.f32 %v1742, %v1839
  %v1846 = vsub.f32 %v1743, %v1839
  %v1847 = vsub.f32 %v1744, %v1839
  %v1848 = vsub.f32 %v1745, %v1839
  %v1849 = vsub.f32 %v1746, %v1839
  %v1850 = vsub.f32 %v1747, %v1839
  %v1851 = vsub.f32 %v1748, %v1839
  %v1852 = vsub.f32 %v1749, %v1839
  %v1853 = vsub.f32 %v1750, %v1839
  %v1854 = vsub.f32 %v1751, %v1839
  %v1855 = vsub.f32 %v1752, %v1839
  %v1856 = vsub.f32 %v1753, %v1839
  %v1857 = vsub.f32 %v1754, %v1839
  %v1858 = vsub.f32 %v1755, %v1840
  %v1859 = vsub.f32 %v1756, %v1840
  %v1860 = vsub.f32 %v1757, %v1840
  %v1861 = vsub.f32 %v1758, %v1840
  %v1862 = vsub.f32 %v1759, %v1840
  %v1863 = vsub.f32 %v1760, %v1840
  %v1864 = vsub.f32 %v1761, %v1840
  %v1865 = vsub.f32 %v1762, %v1840
  %v1866 = vsub.f32 %v1763, %v1840
  %v1867 = vsub.f32 %v1764, %v1840
  %v1868 = vsub.f32 %v1765, %v1840
  %v1869 = vsub.f32 %v1766, %v1840
  %v1870 = vsub.f32 %v1767, %v1840
  %v1871 = vsub.f32 %v1768, %v1840
  %v1872 = vsub.f32 %v1769, %v1840
  %v1873 = vsub.f32 %v1770, %v1840
  %v1874 = vsub.f32 %v1771, %v1841
  %v1875 = vsub.f32 %v1772, %v1841
  %v1876 = vsub.f32 %v1773, %v1841
  %v1877 = vsub.f32 %v1774, %v1841
  %v1878 = vsub.f32 %v1775, %v1841
  %v1879 = vsub.f32 %v1776, %v1841
  %v1880 = vsub.f32 %v1777, %v1841
  %v1881 = vsub.f32 %v1778, %v1841
  %v1882 = vsub.f32 %v1779, %v1841
  %v1883 = vsub.f32 %v1780, %v1841
  %v1884 = vsub.f32 %v1781, %v1841
  %v1885 = vsub.f32 %v1782, %v1841
  %v1886 = vsub.f32 %v1783, %v1841
  %v1887 = vsub.f32 %v1784, %v1841
  %v1888 = vsub.f32 %v1785, %v1841
  %v1889 = vsub.f32 %v1786, %v1841
  %v1890 = vmul.f32 %v1842, %v1842
  %v1891 = vmul.f32 %v1843, %v1843
  %v1892 = vmul.f32 %v1844, %v1844
  %v1893 = vmul.f32 %v1845, %v1845
  %v1894 = vmul.f32 %v1846, %v1846
  %v1895 = vmul.f32 %v1847, %v1847
  %v1896 = vmul.f32 %v1848, %v1848
  %v1897 = vmul.f32 %v1849, %v1849
  %v1898 = vmul.f32 %v1850, %v1850
  %v1899 = vmul.f32 %v1851, %v1851
  %v1900 = vmul.f32 %v1852, %v1852
  %v1901 = vmul.f32 %v1853, %v1853
  %v1902 = vmul.f32 %v1854, %v1854
  %v1903 = vmul.f32 %v1855, %v1855
  %v1904 = vmul.f32 %v1856, %v1856
  %v1905 = vmul.f32 %v1857, %v1857
  %v1906 = vmul.f32 %v1858, %v1858
  %v1907 = vmul.f32 %v1859, %v1859
  %v1908 = vmul.f32 %v1860, %v1860
  %v1909 = vmul.f32 %v1861, %v1861
  %v1910 = vmul.f32 %v1862, %v1862
  %v1911 = vmul.f32 %v1863, %v1863
  %v1912 = vmul.f32 %v1864, %v1864
  %v1913 = vmul.f32 %v1865, %v1865
  %v1914 = vmul.f32 %v1866, %v1866
  %v1915 = vmul.f32 %v1867, %v1867
  %v1916 = vmul.f32 %v1868, %v1868
  %v1917 = vmul.f32 %v1869, %v1869
  %v1918 = vmul.f32 %v1870, %v1870
  %v1919 = vmul.f32 %v1871, %v1871
  %v1920 = vmul.f32 %v1872, %v1872
  %v1921 = vmul.f32 %v1873, %v1873
  %v1922 = vmul.f32 %v1874, %v1874
  %v1923 = vmul.f32 %v1875, %v1875
  %v1924 = vmul.f32 %v1876, %v1876
  %v1925 = vmul.f32 %v1877, %v1877
  %v1926 = vmul.f32 %v1878, %v1878
  %v1927 = vmul.f32 %v1879, %v1879
  %v1928 = vmul.f32 %v1880, %v1880
  %v1929 = vmul.f32 %v1881, %v1881
  %v1930 = vmul.f32 %v1882, %v1882
  %v1931 = vmul.f32 %v1883, %v1883
  %v1932 = vmul.f32 %v1884, %v1884
  %v1933 = vmul.f32 %v1885, %v1885
  %v1934 = vmul.f32 %v1886, %v1886
  %v1935 = vmul.f32 %v1887, %v1887
  %v1936 = vmul.f32 %v1888, %v1888
  %v1937 = vmul.f32 %v1889, %v1889
  %v1938 = vadd.f32 %v1890, %v1891
  %v1939 = vadd.f32 %v1938, %v1892
  %v1940 = vadd.f32 %v1939, %v1893
  %v1941 = vadd.f32 %v1940, %v1894
  %v1942 = vadd.f32 %v1941, %v1895
  %v1943 = vadd.f32 %v1942, %v1896
  %v1944 = vadd.f32 %v1943, %v1897
  %v1945 = vadd.f32 %v1944, %v1898
  %v1946 = vadd.f32 %v1945, %v1899
  %v1947 = vadd.f32 %v1946, %v1900
  %v1948 = vadd.f32 %v1947, %v1901
  %v1949 = vadd.f32 %v1948, %v1902
  %v1950 = vadd.f32 %v1949, %v1903
  %v1951 = vadd.f32 %v1950, %v1904
  %v1952 = vadd.f32 %v1951, %v1905
  %1953 = vadd.xlane.f32.xlu0 %v1952
  %v1954 = vpop.xlane.xlu0 %1953
  %v1955 = vadd.f32 %v1906, %v1907
  %v1956 = vadd.f32 %v1955, %v1908
  %v1957 = vadd.f32 %v1956, %v1909
  %v1958 = vadd.f32 %v1957, %v1910
  %v1959 = vadd.f32 %v1958, %v1911
  %v1960 = vadd.f32 %v1959, %v1912
  %v1961 = vadd.f32 %v1960, %v1913
  %v1962 = vadd.f32 %v1961, %v1914
  %v1963 = vadd.f32 %v1962, %v1915
  %v1964 = vadd.f32 %v1963, %v1916
  %v1965 = vadd.f32 %v1964, %v1917
  %v1966 = vadd.f32 %v1965, %v1918
  %v1967 = vadd.f32 %v1966, %v1919
  %v1968 = vadd.f32 %v1967, %v1920
  %v1969 = vadd.f32 %v1968, %v1921
  %1970 = vadd.xlane.f32.xlu0 %v1969
  %v1971 = vpop.xlane.xlu0 %1970
  %v1972 = vadd.f32 %v1922, %v1923
  %v1973 = vadd.f32 %v1972, %v1924
  %v1974 = vadd.f32 %v1973, %v1925
  %v1975 = vadd.f32 %v1974, %v1926
  %v1976 = vadd.f32 %v1975, %v1927
  %v1977 = vadd.f32 %v1976, %v1928
  %v1978 = vadd.f32 %v1977, %v1929
  %v1979 = vadd.f32 %v1978, %v1930
  %v1980 = vadd.f32 %v1979, %v1931
  %v1981 = vadd.f32 %v1980, %v1932
  %v1982 = vadd.f32 %v1981, %v1933
  %v1983 = vadd.f32 %v1982, %v1934
  %v1984 = vadd.f32 %v1983, %v1935
  %v1985 = vadd.f32 %v1984, %v1936
  %v1986 = vadd.f32 %v1985, %v1937
  %1987 = vadd.xlane.f32.xlu0 %v1986
  %v1988 = vpop.xlane.xlu0 %1987
  %v1989 = vmul.f32 %v1954, %v1838
  %v1990 = vmul.f32 %v1971, %v1838
  %v1991 = vmul.f32 %v1988, %v1838
  %v1992 = vadd.f32 %v1989, 1e-05
  %v1993 = vadd.f32 %v1990, 1e-05
  %v1994 = vadd.f32 %v1991, 1e-05
  %v1995 = vrsqrt.pop %v1992
  %v1996 = vrsqrt.pop %v1993
  %v1997 = vrsqrt.pop %v1994
  %v1998 = vmul.f32 %v274, %v1995
  %v1999 = vmul.f32 %v275, %v1996
  %v2000 = vmul.f32 %v276, %v1997
  %2002 = vset.pattern.permute.xlu0 1
  %2003 = vperm.xlu0 %2002, %v1998
  %v2004 = vpop.permute.xlu0 %2003
  %2007 = vset.pattern.permute.xlu0 1
  %2008 = vperm.xlu0 %2007, %v1999
  %v2009 = vpop.permute.xlu0 %2008
  %2012 = vset.pattern.permute.xlu0 1
  %2013 = vperm.xlu0 %2012, %v2000
  %v2014 = vpop.permute.xlu0 %2013
  %v2016 = vmul.f32 %v1842, %v2004
  %v2017 = vmul.f32 %v1843, %v2004
  %v2018 = vmul.f32 %v1844, %v2004
  %v2019 = vmul.f32 %v1845, %v2004
  %v2020 = vmul.f32 %v1846, %v2004
  %v2021 = vmul.f32 %v1847, %v2004
  %v2022 = vmul.f32 %v1848, %v2004
  %v2023 = vmul.f32 %v1849, %v2004
  %v2024 = vmul.f32 %v1850, %v2004
  %v2025 = vmul.f32 %v1851, %v2004
  %v2026 = vmul.f32 %v1852, %v2004
  %v2027 = vmul.f32 %v1853, %v2004
  %v2028 = vmul.f32 %v1854, %v2004
  %v2029 = vmul.f32 %v1855, %v2004
  %v2030 = vmul.f32 %v1856, %v2004
  %v2031 = vmul.f32 %v1857, %v2004
  %v2032 = vmul.f32 %v1858, %v2009
  %v2033 = vmul.f32 %v1859, %v2009
  %v2034 = vmul.f32 %v1860, %v2009
  %v2035 = vmul.f32 %v1861, %v2009
  %v2036 = vmul.f32 %v1862, %v2009
  %v2037 = vmul.f32 %v1863, %v2009
  %v2038 = vmul.f32 %v1864, %v2009
  %v2039 = vmul.f32 %v1865, %v2009
  %v2040 = vmul.f32 %v1866, %v2009
  %v2041 = vmul.f32 %v1867, %v2009
  %v2042 = vmul.f32 %v1868, %v2009
  %v2043 = vmul.f32 %v1869, %v2009
  %v2044 = vmul.f32 %v1870, %v2009
  %v2045 = vmul.f32 %v1871, %v2009
  %v2046 = vmul.f32 %v1872, %v2009
  %v2047 = vmul.f32 %v1873, %v2009
  %v2048 = vmul.f32 %v1874, %v2014
  %v2049 = vmul.f32 %v1875, %v2014
  %v2050 = vmul.f32 %v1876, %v2014
  %v2051 = vmul.f32 %v1877, %v2014
  %v2052 = vmul.f32 %v1878, %v2014
  %v2053 = vmul.f32 %v1879, %v2014
  %v2054 = vmul.f32 %v1880, %v2014
  %v2055 = vmul.f32 %v1881, %v2014
  %v2056 = vmul.f32 %v1882, %v2014
  %v2057 = vmul.f32 %v1883, %v2014
  %v2058 = vmul.f32 %v1884, %v2014
  %v2059 = vmul.f32 %v1885, %v2014
  %v2060 = vmul.f32 %v1886, %v2014
  %v2061 = vmul.f32 %v1887, %v2014
  %v2062 = vmul.f32 %v1888, %v2014
  %v2063 = vmul.f32 %v1889, %v2014
  %2064 = vset.pattern.permute.xlu0 2
  %2065 = vperm.xlu0 %2064, %v274
  %v2066 = vpop.permute.xlu0 %2065
  %2068 = vset.pattern.permute.xlu0 2
  %2069 = vperm.xlu0 %2068, %v275
  %v2070 = vpop.permute.xlu0 %2069
  %2072 = vset.pattern.permute.xlu0 2
  %2073 = vperm.xlu0 %2072, %v276
  %v2074 = vpop.permute.xlu0 %2073
  %v2076 = vadd.f32 %v2016, %v2066
  %v2077 = vadd.f32 %v2017, %v2066
  %v2078 = vadd.f32 %v2018, %v2066
  %v2079 = vadd.f32 %v2019, %v2066
  %v2080 = vadd.f32 %v2020, %v2066
  %v2081 = vadd.f32 %v2021, %v2066
  %v2082 = vadd.f32 %v2022, %v2066
  %v2083 = vadd.f32 %v2023, %v2066
  %v2084 = vadd.f32 %v2024, %v2066
  %v2085 = vadd.f32 %v2025, %v2066
  %v2086 = vadd.f32 %v2026, %v2066
  %v2087 = vadd.f32 %v2027, %v2066
  %v2088 = vadd.f32 %v2028, %v2066
  %v2089 = vadd.f32 %v2029, %v2066
  %v2090 = vadd.f32 %v2030, %v2066
  %v2091 = vadd.f32 %v2031, %v2066
  %v2092 = vadd.f32 %v2032, %v2070
  %v2093 = vadd.f32 %v2033, %v2070
  %v2094 = vadd.f32 %v2034, %v2070
  %v2095 = vadd.f32 %v2035, %v2070
  %v2096 = vadd.f32 %v2036, %v2070
  %v2097 = vadd.f32 %v2037, %v2070
  %v2098 = vadd.f32 %v2038, %v2070
  %v2099 = vadd.f32 %v2039, %v2070
  %v2100 = vadd.f32 %v2040, %v2070
  %v2101 = vadd.f32 %v2041, %v2070
  %v2102 = vadd.f32 %v2042, %v2070
  %v2103 = vadd.f32 %v2043, %v2070
  %v2104 = vadd.f32 %v2044, %v2070
  %v2105 = vadd.f32 %v2045, %v2070
  %v2106 = vadd.f32 %v2046, %v2070
  %v2107 = vadd.f32 %v2047, %v2070
  %v2108 = vadd.f32 %v2048, %v2074
  %v2109 = vadd.f32 %v2049, %v2074
  %v2110 = vadd.f32 %v2050, %v2074
  %v2111 = vadd.f32 %v2051, %v2074
  %v2112 = vadd.f32 %v2052, %v2074
  %v2113 = vadd.f32 %v2053, %v2074
  %v2114 = vadd.f32 %v2054, %v2074
  %v2115 = vadd.f32 %v2055, %v2074
  %v2116 = vadd.f32 %v2056, %v2074
  %v2117 = vadd.f32 %v2057, %v2074
  %v2118 = vadd.f32 %v2058, %v2074
  %v2119 = vadd.f32 %v2059, %v2074
  %v2120 = vadd.f32 %v2060, %v2074
  %v2121 = vadd.f32 %v2061, %v2074
  %v2122 = vadd.f32 %v2062, %v2074
  %v2123 = vadd.f32 %v2063, %v2074
  %v2124 = vpack.c.bf16 %v2092, %v2076
  %v2125 = vpack.c.bf16 %v2093, %v2077
  %v2126 = vpack.c.bf16 %v2094, %v2078
  %v2127 = vpack.c.bf16 %v2095, %v2079
  %v2128 = vpack.c.bf16 %v2096, %v2080
  %v2129 = vpack.c.bf16 %v2097, %v2081
  %v2130 = vpack.c.bf16 %v2098, %v2082
  %v2131 = vpack.c.bf16 %v2099, %v2083
  %v2132 = vpack.c.bf16 %v2100, %v2084
  %v2133 = vpack.c.bf16 %v2101, %v2085
  %v2134 = vpack.c.bf16 %v2102, %v2086
  %v2135 = vpack.c.bf16 %v2103, %v2087
  %v2136 = vpack.c.bf16 %v2104, %v2088
  %v2137 = vpack.c.bf16 %v2105, %v2089
  %v2138 = vpack.c.bf16 %v2106, %v2090
  %v2139 = vpack.c.bf16 %v2107, %v2091
  %v2140 = vpack.c.bf16 %v2108, %v2108
  %v2141 = vpack.c.bf16 %v2109, %v2109
  %v2142 = vpack.c.bf16 %v2110, %v2110
  %v2143 = vpack.c.bf16 %v2111, %v2111
  %v2144 = vpack.c.bf16 %v2112, %v2112
  %v2145 = vpack.c.bf16 %v2113, %v2113
  %v2146 = vpack.c.bf16 %v2114, %v2114
  %v2147 = vpack.c.bf16 %v2115, %v2115
  %v2148 = vpack.c.bf16 %v2116, %v2116
  %v2149 = vpack.c.bf16 %v2117, %v2117
  %v2150 = vpack.c.bf16 %v2118, %v2118
  %v2151 = vpack.c.bf16 %v2119, %v2119
  %v2152 = vpack.c.bf16 %v2120, %v2120
  %v2153 = vpack.c.bf16 %v2121, %v2121
  %v2154 = vpack.c.bf16 %v2122, %v2122
  %v2155 = vpack.c.bf16 %v2123, %v2123
  %v2188 = vunpack.c.l.b16 %v2124
  %v2189 = vunpack.c.l.b16 %v2125
  %v2190 = vunpack.c.l.b16 %v2126
  %v2191 = vunpack.c.l.b16 %v2127
  %v2192 = vunpack.c.l.b16 %v2128
  %v2193 = vunpack.c.l.b16 %v2129
  %v2194 = vunpack.c.l.b16 %v2130
  %v2195 = vunpack.c.l.b16 %v2131
  %v2196 = vunpack.c.l.b16 %v2132
  %v2197 = vunpack.c.l.b16 %v2133
  %v2198 = vunpack.c.l.b16 %v2134
  %v2199 = vunpack.c.l.b16 %v2135
  %v2200 = vunpack.c.l.b16 %v2136
  %v2201 = vunpack.c.l.b16 %v2137
  %v2202 = vunpack.c.l.b16 %v2138
  %v2203 = vunpack.c.l.b16 %v2139
  %v2204 = vunpack.c.h.b16 %v2124
  %v2205 = vunpack.c.h.b16 %v2125
  %v2206 = vunpack.c.h.b16 %v2126
  %v2207 = vunpack.c.h.b16 %v2127
  %v2208 = vunpack.c.h.b16 %v2128
  %v2209 = vunpack.c.h.b16 %v2129
  %v2210 = vunpack.c.h.b16 %v2130
  %v2211 = vunpack.c.h.b16 %v2131
  %v2212 = vunpack.c.h.b16 %v2132
  %v2213 = vunpack.c.h.b16 %v2133
  %v2214 = vunpack.c.h.b16 %v2134
  %v2215 = vunpack.c.h.b16 %v2135
  %v2216 = vunpack.c.h.b16 %v2136
  %v2217 = vunpack.c.h.b16 %v2137
  %v2218 = vunpack.c.h.b16 %v2138
  %v2219 = vunpack.c.h.b16 %v2139
  %v2220 = vunpack.c.l.b16 %v2140
  %v2221 = vunpack.c.l.b16 %v2141
  %v2222 = vunpack.c.l.b16 %v2142
  %v2223 = vunpack.c.l.b16 %v2143
  %v2224 = vunpack.c.l.b16 %v2144
  %v2225 = vunpack.c.l.b16 %v2145
  %v2226 = vunpack.c.l.b16 %v2146
  %v2227 = vunpack.c.l.b16 %v2147
  %v2228 = vunpack.c.l.b16 %v2148
  %v2229 = vunpack.c.l.b16 %v2149
  %v2230 = vunpack.c.l.b16 %v2150
  %v2231 = vunpack.c.l.b16 %v2151
  %v2232 = vunpack.c.l.b16 %v2152
  %v2233 = vunpack.c.l.b16 %v2153
  %v2234 = vunpack.c.l.b16 %v2154
  %v2235 = vunpack.c.l.b16 %v2155
  %v2236 = vpack.c.b16 %v2189, %v2188
  %v2237 = vpack.c.b16 %v2191, %v2190
  %v2238 = vpack.c.b16 %v2193, %v2192
  %v2239 = vpack.c.b16 %v2195, %v2194
  %v2240 = vpack.c.b16 %v2197, %v2196
  %v2241 = vpack.c.b16 %v2199, %v2198
  %v2242 = vpack.c.b16 %v2201, %v2200
  %v2243 = vpack.c.b16 %v2203, %v2202
  %v2244 = vpack.c.b16 %v2205, %v2204
  %v2245 = vpack.c.b16 %v2207, %v2206
  %v2246 = vpack.c.b16 %v2209, %v2208
  %v2247 = vpack.c.b16 %v2211, %v2210
  %v2248 = vpack.c.b16 %v2213, %v2212
  %v2249 = vpack.c.b16 %v2215, %v2214
  %v2250 = vpack.c.b16 %v2217, %v2216
  %v2251 = vpack.c.b16 %v2219, %v2218
  %v2252 = vpack.c.b16 %v2221, %v2220
  %v2253 = vpack.c.b16 %v2223, %v2222
  %v2254 = vpack.c.b16 %v2225, %v2224
  %v2255 = vpack.c.b16 %v2227, %v2226
  %v2256 = vpack.c.b16 %v2229, %v2228
  %v2257 = vpack.c.b16 %v2231, %v2230
  %v2258 = vpack.c.b16 %v2233, %v2232
  %v2259 = vpack.c.b16 %v2235, %v2234
  %2284 = vst [vmem:[%s3] sm:$0xff] %v2236
  %2285 = vst [vmem:[%s3 + $0x8] sm:$0xff] %v2237
  %2286 = vst [vmem:[%s3 + $0x10] sm:$0xff] %v2238
  %2287 = vst [vmem:[%s3 + $0x18] sm:$0xff] %v2239
  %2288 = vst [vmem:[%s3 + $0x20] sm:$0xff] %v2240
  %2289 = vst [vmem:[%s3 + $0x28] sm:$0xff] %v2241
  %2290 = vst [vmem:[%s3 + $0x30] sm:$0xff] %v2242
  %2291 = vst [vmem:[%s3 + $0x38] sm:$0xff] %v2243
  %2292 = vst [vmem:[%s3 + $0x40] sm:$0xff] %v2244
  %2293 = vst [vmem:[%s3 + $0x48] sm:$0xff] %v2245
  %2294 = vst [vmem:[%s3 + $0x50] sm:$0xff] %v2246
  %2295 = vst [vmem:[%s3 + $0x58] sm:$0xff] %v2247
  %2296 = vst [vmem:[%s3 + $0x60] sm:$0xff] %v2248
  %2297 = vst [vmem:[%s3 + $0x68] sm:$0xff] %v2249
  %2298 = vst [vmem:[%s3 + $0x70] sm:$0xff] %v2250
  %2299 = vst [vmem:[%s3 + $0x78] sm:$0xff] %v2251
  %2300 = vst [vmem:[%s3 + $0x80] sm:$0xff] %v2252
  %2301 = vst [vmem:[%s3 + $0x88] sm:$0xff] %v2253
  %2302 = vst [vmem:[%s3 + $0x90] sm:$0xff] %v2254
  %2303 = vst [vmem:[%s3 + $0x98] sm:$0xff] %v2255
  %2304 = vst [vmem:[%s3 + $0xa0] sm:$0xff] %v2256
  %2305 = vst [vmem:[%s3 + $0xa8] sm:$0xff] %v2257
  %2306 = vst [vmem:[%s3 + $0xb0] sm:$0xff] %v2258
  %2307 = vst [vmem:[%s3 + $0xb8] sm:$0xff] %v2259
  // Predicated region
  $region14: #{_forward.4} parent=0 // pred_check
    _
  $region15: #{_forward.4} parent=0 // pred_check_branch
    %2309 = sbr.rel (0) target = $region17
  $region16: #{_forward.4} parent=0 // pred_region
    _
  $region17: #{_forward.4} parent=0 // pred_fallthru
    _
  // Predicated region
  $region18: #{_forward.4} parent=0 // pred_check
    _
  $region19: #{_forward.4} parent=0 // pred_check_branch
    %2311 = sbr.rel (0) target = $region21
  $region20: #{_forward.4} parent=0 // pred_region
    _
  $region21: #{_forward.4} parent=0 // pred_fallthru
    _

// kernel: _forward.5
$region0: #{_forward.5}
  #allocation0 [shape = 'u32[]', space=smem, size = 0x4, offset = 0x4, fixed_abs, tag = 'smem constant byte address 0x4 - core index']
  #allocation1 [shape = 'u32[144,128]{1,0:T(1,128)}', space=vmem, size = 0x12000, scoped, tag = 'internal scratch']
  %s0 = inlined_call_operand.vmem [shape: bf16[512,216], index: 0, kind: input, shape index: {}]
  %s1 = inlined_call_operand.vmem [shape: bf16[24,216], index: 1, kind: input, shape index: {}]
  %s2 = inlined_call_operand.vmem [shape: f32[24,3], index: 2, kind: input, shape index: {}]
  %s3 = inlined_call_operand.vmem [shape: bf16[24,512], index: 3, kind: output, shape index: {}]
  %s4 = sld [smem:[#allocation0]]
  $region22: #{_forward.5} parent=0
    _
  %s6 = ssub.s32 1, %s4
  %s7 = scalar_select 0, %s6, %s4
  // Predicated region
  $region2: #{_forward.5} parent=0 // pred_check
    _
  $region3: #{_forward.5} parent=0 // pred_check_branch
    %9 = sbr.rel (0) target = $region5
  $region4: #{_forward.5} parent=0 // pred_region
    _
  $region5: #{_forward.5} parent=0 // pred_fallthru
    _
  // Predicated region
  $region6: #{_forward.5} parent=0 // pred_check
    _
  $region7: #{_forward.5} parent=0 // pred_check_branch
    %11 = sbr.rel (0) target = $region9
  $region8: #{_forward.5} parent=0 // pred_region
    _
  $region9: #{_forward.5} parent=0 // pred_fallthru
    _
  // Predicated region
  $region10: #{_forward.5} parent=0 // pred_check
    _
  $region11: #{_forward.5} parent=0 // pred_check_branch
    %13 = sbr.rel (0) target = $region13
  $region12: #{_forward.5} parent=0 // pred_region
    _
  $region13: #{_forward.5} parent=0 // pred_fallthru
    _
  %v14 = vld [vmem:[%s1] sm:$0xff]
  %v15 = vld [vmem:[%s1 + $0x8] sm:$0xff]
  %v16 = vld [vmem:[%s1 + $0x10] sm:$0xff]
  %v17 = vld [vmem:[%s0] sm:$0xff]
  %v18 = vld [vmem:[%s0 + $0x8] sm:$0xff]
  %v19 = vld [vmem:[%s0 + $0x10] sm:$0xff]
  %v20 = vld [vmem:[%s0 + $0x18] sm:$0xff]
  %v21 = vld [vmem:[%s0 + $0x20] sm:$0xff]
  %v22 = vld [vmem:[%s0 + $0x28] sm:$0xff]
  %v23 = vld [vmem:[%s0 + $0x30] sm:$0xff]
  %v24 = vld [vmem:[%s0 + $0x38] sm:$0xff]
  %v25 = vld [vmem:[%s0 + $0x40] sm:$0xff]
  %v26 = vld [vmem:[%s0 + $0x48] sm:$0xff]
  %v27 = vld [vmem:[%s0 + $0x50] sm:$0xff]
  %v28 = vld [vmem:[%s0 + $0x58] sm:$0xff]
  %v29 = vld [vmem:[%s0 + $0x60] sm:$0xff]
  %v30 = vld [vmem:[%s0 + $0x68] sm:$0xff]
  %v31 = vld [vmem:[%s0 + $0x70] sm:$0xff]
  %v32 = vld [vmem:[%s0 + $0x78] sm:$0xff]
  %v33 = vld [vmem:[%s0 + $0x80] sm:$0xff]
  %v34 = vld [vmem:[%s0 + $0x88] sm:$0xff]
  %v35 = vld [vmem:[%s0 + $0x90] sm:$0xff]
  %v36 = vld [vmem:[%s0 + $0x98] sm:$0xff]
  %v37 = vld [vmem:[%s0 + $0xa0] sm:$0xff]
  %v38 = vld [vmem:[%s0 + $0xa8] sm:$0xff]
  %v39 = vld [vmem:[%s0 + $0xb0] sm:$0xff]
  %v40 = vld [vmem:[%s0 + $0xb8] sm:$0xff]
  %v41 = vld [vmem:[%s0 + $0xc0] sm:$0xff]
  %v42 = vld [vmem:[%s0 + $0xc8] sm:$0xff]
  %v43 = vld [vmem:[%s0 + $0xd0] sm:$0xff]
  %v44 = vld [vmem:[%s0 + $0xd8] sm:$0xff]
  %v45 = vld [vmem:[%s0 + $0xe0] sm:$0xff]
  %v46 = vld [vmem:[%s0 + $0xe8] sm:$0xff]
  %v47 = vld [vmem:[%s0 + $0xf0] sm:$0xff]
  %v48 = vld [vmem:[%s0 + $0xf8] sm:$0xff]
  %v49 = vld [vmem:[%s0 + $0x100] sm:$0xff]
  %v50 = vld [vmem:[%s0 + $0x108] sm:$0xff]
  %v51 = vld [vmem:[%s0 + $0x110] sm:$0xff]
  %v52 = vld [vmem:[%s0 + $0x118] sm:$0xff]
  %v53 = vld [vmem:[%s0 + $0x120] sm:$0xff]
  %v54 = vld [vmem:[%s0 + $0x128] sm:$0xff]
  %v55 = vld [vmem:[%s0 + $0x130] sm:$0xff]
  %v56 = vld [vmem:[%s0 + $0x138] sm:$0xff]
  %v57 = vld [vmem:[%s0 + $0x140] sm:$0xff]
  %v58 = vld [vmem:[%s0 + $0x148] sm:$0xff]
  %v59 = vld [vmem:[%s0 + $0x150] sm:$0xff]
  %v60 = vld [vmem:[%s0 + $0x158] sm:$0xff]
  %v61 = vld [vmem:[%s0 + $0x160] sm:$0xff]
  %v62 = vld [vmem:[%s0 + $0x168] sm:$0xff]
  %v63 = vld [vmem:[%s0 + $0x170] sm:$0xff]
  %v64 = vld [vmem:[%s0 + $0x178] sm:$0xff]
  %v65 = vld [vmem:[%s0 + $0x180] sm:$0xff]
  %v66 = vld [vmem:[%s0 + $0x188] sm:$0xff]
  %v67 = vld [vmem:[%s0 + $0x190] sm:$0xff]
  %v68 = vld [vmem:[%s0 + $0x198] sm:$0xff]
  %v69 = vld [vmem:[%s0 + $0x1a0] sm:$0xff]
  %v70 = vld [vmem:[%s0 + $0x1a8] sm:$0xff]
  %v71 = vld [vmem:[%s0 + $0x1b0] sm:$0xff]
  %v72 = vld [vmem:[%s0 + $0x1b8] sm:$0xff]
  %v73 = vld [vmem:[%s0 + $0x1c0] sm:$0xff]
  %v74 = vld [vmem:[%s0 + $0x1c8] sm:$0xff]
  %v75 = vld [vmem:[%s0 + $0x1d0] sm:$0xff]
  %v76 = vld [vmem:[%s0 + $0x1d8] sm:$0xff]
  %v77 = vld [vmem:[%s0 + $0x1e0] sm:$0xff]
  %v78 = vld [vmem:[%s0 + $0x1e8] sm:$0xff]
  %v79 = vld [vmem:[%s0 + $0x1f0] sm:$0xff]
  %v80 = vld [vmem:[%s0 + $0x1f8] sm:$0xff]
  %v81 = vld [vmem:[%s2] sm:$0xff]
  %v82 = vld [vmem:[%s2 + $0x8] sm:$0xff]
  %v83 = vld [vmem:[%s2 + $0x10] sm:$0xff]
  %85 = vset.pattern.permute.xlu0 0
  %86 = vperm.xlu0 %85, %v81
  %v87 = vpop.permute.xlu0 %86
  %90 = vset.pattern.permute.xlu0 0
  %91 = vperm.xlu0 %90, %v82
  %v92 = vpop.permute.xlu0 %91
  %95 = vset.pattern.permute.xlu0 0
  %96 = vperm.xlu0 %95, %v83
  %v97 = vpop.permute.xlu0 %96
  %v102 = vunpack.c.l.b16 %v14
  %v103 = vunpack.c.h.b16 %v14
  %v104 = vunpack.c.l.b16 %v15
  %v105 = vunpack.c.h.b16 %v15
  %v106 = vunpack.c.l.b16 %v16
  %v107 = vunpack.c.h.b16 %v16
  %v108 = vpack.c.b16 %v104, %v102
  %v109 = vpack.c.b16 %v105, %v103
  %v110 = vpack.c.b16 %v106, %v106
  %v111 = vpack.c.b16 %v107, %v107
  %v178 = vunpack.c.l.b16 %v17
  %v179 = vunpack.c.h.b16 %v17
  %v180 = vunpack.c.l.b16 %v18
  %v181 = vunpack.c.h.b16 %v18
  %v182 = vunpack.c.l.b16 %v19
  %v183 = vunpack.c.h.b16 %v19
  %v184 = vunpack.c.l.b16 %v20
  %v185 = vunpack.c.h.b16 %v20
  %v186 = vunpack.c.l.b16 %v21
  %v187 = vunpack.c.h.b16 %v21
  %v188 = vunpack.c.l.b16 %v22
  %v189 = vunpack.c.h.b16 %v22
  %v190 = vunpack.c.l.b16 %v23
  %v191 = vunpack.c.h.b16 %v23
  %v192 = vunpack.c.l.b16 %v24
  %v193 = vunpack.c.h.b16 %v24
  %v194 = vunpack.c.l.b16 %v25
  %v195 = vunpack.c.h.b16 %v25
  %v196 = vunpack.c.l.b16 %v26
  %v197 = vunpack.c.h.b16 %v26
  %v198 = vunpack.c.l.b16 %v27
  %v199 = vunpack.c.h.b16 %v27
  %v200 = vunpack.c.l.b16 %v28
  %v201 = vunpack.c.h.b16 %v28
  %v202 = vunpack.c.l.b16 %v29
  %v203 = vunpack.c.h.b16 %v29
  %v204 = vunpack.c.l.b16 %v30
  %v205 = vunpack.c.h.b16 %v30
  %v206 = vunpack.c.l.b16 %v31
  %v207 = vunpack.c.h.b16 %v31
  %v208 = vunpack.c.l.b16 %v32
  %v209 = vunpack.c.h.b16 %v32
  %v210 = vunpack.c.l.b16 %v33
  %v211 = vunpack.c.h.b16 %v33
  %v212 = vunpack.c.l.b16 %v34
  %v213 = vunpack.c.h.b16 %v34
  %v214 = vunpack.c.l.b16 %v35
  %v215 = vunpack.c.h.b16 %v35
  %v216 = vunpack.c.l.b16 %v36
  %v217 = vunpack.c.h.b16 %v36
  %v218 = vunpack.c.l.b16 %v37
  %v219 = vunpack.c.h.b16 %v37
  %v220 = vunpack.c.l.b16 %v38
  %v221 = vunpack.c.h.b16 %v38
  %v222 = vunpack.c.l.b16 %v39
  %v223 = vunpack.c.h.b16 %v39
  %v224 = vunpack.c.l.b16 %v40
  %v225 = vunpack.c.h.b16 %v40
  %v226 = vunpack.c.l.b16 %v41
  %v227 = vunpack.c.h.b16 %v41
  %v228 = vunpack.c.l.b16 %v42
  %v229 = vunpack.c.h.b16 %v42
  %v230 = vunpack.c.l.b16 %v43
  %v231 = vunpack.c.h.b16 %v43
  %v232 = vunpack.c.l.b16 %v44
  %v233 = vunpack.c.h.b16 %v44
  %v234 = vunpack.c.l.b16 %v45
  %v235 = vunpack.c.h.b16 %v45
  %v236 = vunpack.c.l.b16 %v46
  %v237 = vunpack.c.h.b16 %v46
  %v238 = vunpack.c.l.b16 %v47
  %v239 = vunpack.c.h.b16 %v47
  %v240 = vunpack.c.l.b16 %v48
  %v241 = vunpack.c.h.b16 %v48
  %v242 = vunpack.c.l.b16 %v49
  %v243 = vunpack.c.h.b16 %v49
  %v244 = vunpack.c.l.b16 %v50
  %v245 = vunpack.c.h.b16 %v50
  %v246 = vunpack.c.l.b16 %v51
  %v247 = vunpack.c.h.b16 %v51
  %v248 = vunpack.c.l.b16 %v52
  %v249 = vunpack.c.h.b16 %v52
  %v250 = vunpack.c.l.b16 %v53
  %v251 = vunpack.c.h.b16 %v53
  %v252 = vunpack.c.l.b16 %v54
  %v253 = vunpack.c.h.b16 %v54
  %v254 = vunpack.c.l.b16 %v55
  %v255 = vunpack.c.h.b16 %v55
  %v256 = vunpack.c.l.b16 %v56
  %v257 = vunpack.c.h.b16 %v56
  %v258 = vunpack.c.l.b16 %v57
  %v259 = vunpack.c.h.b16 %v57
  %v260 = vunpack.c.l.b16 %v58
  %v261 = vunpack.c.h.b16 %v58
  %v262 = vunpack.c.l.b16 %v59
  %v263 = vunpack.c.h.b16 %v59
  %v264 = vunpack.c.l.b16 %v60
  %v265 = vunpack.c.h.b16 %v60
  %v266 = vunpack.c.l.b16 %v61
  %v267 = vunpack.c.h.b16 %v61
  %v268 = vunpack.c.l.b16 %v62
  %v269 = vunpack.c.h.b16 %v62
  %v270 = vunpack.c.l.b16 %v63
  %v271 = vunpack.c.h.b16 %v63
  %v272 = vunpack.c.l.b16 %v64
  %v273 = vunpack.c.h.b16 %v64
  %v274 = vunpack.c.l.b16 %v65
  %v275 = vunpack.c.h.b16 %v65
  %v276 = vunpack.c.l.b16 %v66
  %v277 = vunpack.c.h.b16 %v66
  %v278 = vunpack.c.l.b16 %v67
  %v279 = vunpack.c.h.b16 %v67
  %v280 = vunpack.c.l.b16 %v68
  %v281 = vunpack.c.h.b16 %v68
  %v282 = vunpack.c.l.b16 %v69
  %v283 = vunpack.c.h.b16 %v69
  %v284 = vunpack.c.l.b16 %v70
  %v285 = vunpack.c.h.b16 %v70
  %v286 = vunpack.c.l.b16 %v71
  %v287 = vunpack.c.h.b16 %v71
  %v288 = vunpack.c.l.b16 %v72
  %v289 = vunpack.c.h.b16 %v72
  %v290 = vunpack.c.l.b16 %v73
  %v291 = vunpack.c.h.b16 %v73
  %v292 = vunpack.c.l.b16 %v74
  %v293 = vunpack.c.h.b16 %v74
  %v294 = vunpack.c.l.b16 %v75
  %v295 = vunpack.c.h.b16 %v75
  %v296 = vunpack.c.l.b16 %v76
  %v297 = vunpack.c.h.b16 %v76
  %v298 = vunpack.c.l.b16 %v77
  %v299 = vunpack.c.h.b16 %v77
  %v300 = vunpack.c.l.b16 %v78
  %v301 = vunpack.c.h.b16 %v78
  %v302 = vunpack.c.l.b16 %v79
  %v303 = vunpack.c.h.b16 %v79
  %v304 = vunpack.c.l.b16 %v80
  %v305 = vunpack.c.h.b16 %v80
  %v306 = vpack.c.b16 %v180, %v178
  %v307 = vpack.c.b16 %v181, %v179
  %v308 = vpack.c.b16 %v184, %v182
  %v309 = vpack.c.b16 %v185, %v183
  %v310 = vpack.c.b16 %v188, %v186
  %v311 = vpack.c.b16 %v189, %v187
  %v312 = vpack.c.b16 %v192, %v190
  %v313 = vpack.c.b16 %v193, %v191
  %v314 = vpack.c.b16 %v196, %v194
  %v315 = vpack.c.b16 %v197, %v195
  %v316 = vpack.c.b16 %v200, %v198
  %v317 = vpack.c.b16 %v201, %v199
  %v318 = vpack.c.b16 %v204, %v202
  %v319 = vpack.c.b16 %v205, %v203
  %v320 = vpack.c.b16 %v208, %v206
  %v321 = vpack.c.b16 %v209, %v207
  %v322 = vpack.c.b16 %v212, %v210
  %v323 = vpack.c.b16 %v213, %v211
  %v324 = vpack.c.b16 %v216, %v214
  %v325 = vpack.c.b16 %v217, %v215
  %v326 = vpack.c.b16 %v220, %v218
  %v327 = vpack.c.b16 %v221, %v219
  %v328 = vpack.c.b16 %v224, %v222
  %v329 = vpack.c.b16 %v225, %v223
  %v330 = vpack.c.b16 %v228, %v226
  %v331 = vpack.c.b16 %v229, %v227
  %v332 = vpack.c.b16 %v232, %v230
  %v333 = vpack.c.b16 %v233, %v231
  %v334 = vpack.c.b16 %v236, %v234
  %v335 = vpack.c.b16 %v237, %v235
  %v336 = vpack.c.b16 %v240, %v238
  %v337 = vpack.c.b16 %v241, %v239
  %v338 = vpack.c.b16 %v244, %v242
  %v339 = vpack.c.b16 %v245, %v243
  %v340 = vpack.c.b16 %v248, %v246
  %v341 = vpack.c.b16 %v249, %v247
  %v342 = vpack.c.b16 %v252, %v250
  %v343 = vpack.c.b16 %v253, %v251
  %v344 = vpack.c.b16 %v256, %v254
  %v345 = vpack.c.b16 %v257, %v255
  %v346 = vpack.c.b16 %v260, %v258
  %v347 = vpack.c.b16 %v261, %v259
  %v348 = vpack.c.b16 %v264, %v262
  %v349 = vpack.c.b16 %v265, %v263
  %v350 = vpack.c.b16 %v268, %v266
  %v351 = vpack.c.b16 %v269, %v267
  %v352 = vpack.c.b16 %v272, %v270
  %v353 = vpack.c.b16 %v273, %v271
  %v354 = vpack.c.b16 %v276, %v274
  %v355 = vpack.c.b16 %v277, %v275
  %v356 = vpack.c.b16 %v280, %v278
  %v357 = vpack.c.b16 %v281, %v279
  %v358 = vpack.c.b16 %v284, %v282
  %v359 = vpack.c.b16 %v285, %v283
  %v360 = vpack.c.b16 %v288, %v286
  %v361 = vpack.c.b16 %v289, %v287
  %v362 = vpack.c.b16 %v292, %v290
  %v363 = vpack.c.b16 %v293, %v291
  %v364 = vpack.c.b16 %v296, %v294
  %v365 = vpack.c.b16 %v297, %v295
  %v366 = vpack.c.b16 %v300, %v298
  %v367 = vpack.c.b16 %v301, %v299
  %v368 = vpack.c.b16 %v304, %v302
  %v369 = vpack.c.b16 %v305, %v303
  %vm402 = vcmask 719872
  %v404 = vsel %vm402, %v109, 0
  %v407 = vsel %vm402, %v111, 0
  %v410 = vsel %vm402, %v307, 0
  %v413 = vsel %vm402, %v309, 0
  %v416 = vsel %vm402, %v311, 0
  %v419 = vsel %vm402, %v313, 0
  %v422 = vsel %vm402, %v315, 0
  %v425 = vsel %vm402, %v317, 0
  %v428 = vsel %vm402, %v319, 0
  %v431 = vsel %vm402, %v321, 0
  %v434 = vsel %vm402, %v323, 0
  %v437 = vsel %vm402, %v325, 0
  %v440 = vsel %vm402, %v327, 0
  %v443 = vsel %vm402, %v329, 0
  %v446 = vsel %vm402, %v331, 0
  %v449 = vsel %vm402, %v333, 0
  %v452 = vsel %vm402, %v335, 0
  %v455 = vsel %vm402, %v337, 0
  %v458 = vsel %vm402, %v339, 0
  %v461 = vsel %vm402, %v341, 0
  %v464 = vsel %vm402, %v343, 0
  %v467 = vsel %vm402, %v345, 0
  %v470 = vsel %vm402, %v347, 0
  %v473 = vsel %vm402, %v349, 0
  %v476 = vsel %vm402, %v351, 0
  %v479 = vsel %vm402, %v353, 0
  %v482 = vsel %vm402, %v355, 0
  %v485 = vsel %vm402, %v357, 0
  %v488 = vsel %vm402, %v359, 0
  %v491 = vsel %vm402, %v361, 0
  %v494 = vsel %vm402, %v363, 0
  %v497 = vsel %vm402, %v365, 0
  %v500 = vsel %vm402, %v367, 0
  %v503 = vsel %vm402, %v369, 0
  %505 = vmatprep.subr.bf16.mxu0 %v431
  %506 = vmatpush1.bf16.xpose.msra.mxu0 %v320
  %507 = vmatprep.subr.bf16.mxu0 %v428
  %508 = vmatpush1.bf16.xpose.msra.mxu0 %v318
  %509 = vmatprep.subr.bf16.mxu0 %v425
  %510 = vmatpush1.bf16.xpose.msra.mxu0 %v316
  %511 = vmatprep.subr.bf16.mxu0 %v422
  %512 = vmatpush1.bf16.xpose.msra.mxu0 %v314
  %513 = vmatprep.subr.bf16.mxu0 %v419
  %514 = vmatpush1.bf16.xpose.msra.mxu0 %v312
  %515 = vmatprep.subr.bf16.mxu0 %v416
  %516 = vmatpush1.bf16.xpose.msra.mxu0 %v310
  %517 = vmatprep.subr.bf16.mxu0 %v413
  %518 = vmatpush1.bf16.xpose.msra.mxu0 %v308
  %519 = vmatprep.subr.bf16.mxu0 %v410
  %520 = vmatpush1.bf16.xpose.msra.mxu0 %v306
  %521 = vmatprep.subr.bf16.mxu0 %v455
  %522 = vmatpush2.bf16.xpose.msra.mxu0 %v336
  %523 = vmatprep.subr.bf16.mxu0 %v452
  %524 = vmatpush2.bf16.xpose.msra.mxu0 %v334
  %525 = vmatprep.subr.bf16.mxu0 %v449
  %526 = vmatpush2.bf16.xpose.msra.mxu0 %v332
  %527 = vmatprep.subr.bf16.mxu0 %v446
  %528 = vmatpush2.bf16.xpose.msra.mxu0 %v330
  %529 = vmatprep.subr.bf16.mxu0 %v443
  %530 = vmatpush2.bf16.xpose.msra.mxu0 %v328
  %531 = vmatprep.subr.bf16.mxu0 %v440
  %532 = vmatpush2.bf16.xpose.msra.mxu0 %v326
  %533 = vmatprep.subr.bf16.mxu0 %v437
  %534 = vmatpush2.bf16.xpose.msra.mxu0 %v324
  %535 = vmatprep.subr.bf16.mxu0 %v434
  %536 = vmatpush2.bf16.xpose.msra.mxu0 %v322
  %537 = vmatprep.mubr.bf16.mxu0 %v404
  %538 = vmatmul.mubr.bf16.gmra.mxu0 %v108
  %v539 = vpop.f32.mrf.mxu0
  %v540 = vadd.f32 %v87, %v539
  %v541 = vpop.f32.mrf.mxu0
  %v542 = vadd.f32 %v87, %v541
  %v543 = vpop.f32.mrf.mxu0
  %v544 = vadd.f32 %v92, %v543
  %v545 = vpop.f32.mrf.mxu0
  %v546 = vadd.f32 %v92, %v545
  %547 = vmatprep.mubr.bf16.mxu0 %v407
  %548 = vmatmul.mubr.bf16.gmra.mxu0 %v110
  %v549 = vpop.f32.mrf.mxu0
  %v550 = vadd.f32 %v97, %v549
  %v551 = vpop.f32.mrf.mxu0
  %v552 = vadd.f32 %v97, %v551
  %v553 = vpop.f32.mrf.mxu0
  %v554 = vpop.f32.mrf.mxu0
  %555 = vdwg.mxu0
  %556 = vmatprep.subr.bf16.mxu0 %v479
  %557 = vmatpush1.bf16.xpose.msra.mxu0 %v352
  %558 = vmatprep.subr.bf16.mxu0 %v476
  %559 = vmatpush1.bf16.xpose.msra.mxu0 %v350
  %560 = vmatprep.subr.bf16.mxu0 %v473
  %561 = vmatpush1.bf16.xpose.msra.mxu0 %v348
  %562 = vmatprep.subr.bf16.mxu0 %v470
  %563 = vmatpush1.bf16.xpose.msra.mxu0 %v346
  %564 = vmatprep.subr.bf16.mxu0 %v467
  %565 = vmatpush1.bf16.xpose.msra.mxu0 %v344
  %566 = vmatprep.subr.bf16.mxu0 %v464
  %567 = vmatpush1.bf16.xpose.msra.mxu0 %v342
  %568 = vmatprep.subr.bf16.mxu0 %v461
  %569 = vmatpush1.bf16.xpose.msra.mxu0 %v340
  %570 = vmatprep.subr.bf16.mxu0 %v458
  %571 = vmatpush1.bf16.xpose.msra.mxu0 %v338
  %572 = vmatprep.subr.bf16.mxu0 %v503
  %573 = vmatpush2.bf16.xpose.msra.mxu0 %v368
  %574 = vmatprep.subr.bf16.mxu0 %v500
  %575 = vmatpush2.bf16.xpose.msra.mxu0 %v366
  %576 = vmatprep.subr.bf16.mxu0 %v497
  %577 = vmatpush2.bf16.xpose.msra.mxu0 %v364
  %578 = vmatprep.subr.bf16.mxu0 %v494
  %579 = vmatpush2.bf16.xpose.msra.mxu0 %v362
  %580 = vmatprep.subr.bf16.mxu0 %v491
  %581 = vmatpush2.bf16.xpose.msra.mxu0 %v360
  %582 = vmatprep.subr.bf16.mxu0 %v488
  %583 = vmatpush2.bf16.xpose.msra.mxu0 %v358
  %584 = vmatprep.subr.bf16.mxu0 %v485
  %585 = vmatpush2.bf16.xpose.msra.mxu0 %v356
  %586 = vmatprep.subr.bf16.mxu0 %v482
  %587 = vmatpush2.bf16.xpose.msra.mxu0 %v354
  %588 = vmatprep.mubr.bf16.mxu0 %v404
  %589 = vmatmul.mubr.bf16.gmra.mxu0 %v108
  %v590 = vpop.f32.mrf.mxu0
  %v591 = vadd.f32 %v87, %v590
  %v592 = vpop.f32.mrf.mxu0
  %v593 = vadd.f32 %v87, %v592
  %v594 = vpop.f32.mrf.mxu0
  %v595 = vadd.f32 %v92, %v594
  %v596 = vpop.f32.mrf.mxu0
  %v597 = vadd.f32 %v92, %v596
  %598 = vmatprep.mubr.bf16.mxu0 %v407
  %599 = vmatmul.mubr.bf16.gmra.mxu0 %v110
  %v600 = vpop.f32.mrf.mxu0
  %v601 = vadd.f32 %v97, %v600
  %v602 = vpop.f32.mrf.mxu0
  %v603 = vadd.f32 %v97, %v602
  %v604 = vpop.f32.mrf.mxu0
  %v605 = vpop.f32.mrf.mxu0
  %606 = vdwg.mxu0
  %v607 = vmax.f32 %v540, 0.0
  %v608 = vmax.f32 %v542, 0.0
  %v609 = vmax.f32 %v591, 0.0
  %v610 = vmax.f32 %v593, 0.0
  %v611 = vmax.f32 %v544, 0.0
  %v612 = vmax.f32 %v546, 0.0
  %v613 = vmax.f32 %v595, 0.0
  %v614 = vmax.f32 %v597, 0.0
  %v615 = vmax.f32 %v550, 0.0
  %v616 = vmax.f32 %v552, 0.0
  %v617 = vmax.f32 %v601, 0.0
  %v618 = vmax.f32 %v603, 0.0
  %v619 = vadd.f32 %v607, %v608
  %v620 = vadd.f32 %v619, %v609
  %v621 = vadd.f32 %v620, %v610
  %622 = vadd.xlane.f32.xlu0 %v621
  %v623 = vpop.xlane.xlu0 %622
  %v624 = vadd.f32 %v611, %v612
  %v625 = vadd.f32 %v624, %v613
  %v626 = vadd.f32 %v625, %v614
  %627 = vadd.xlane.f32.xlu0 %v626
  %v628 = vpop.xlane.xlu0 %627
  %v629 = vadd.f32 %v615, %v616
  %v630 = vadd.f32 %v629, %v617
  %v631 = vadd.f32 %v630, %v618
  %632 = vadd.xlane.f32.xlu0 %v631
  %v633 = vpop.xlane.xlu0 %632
  %v634 = vrcp.pop 512.0
  %v635 = vmul.f32 %v623, %v634
  %v636 = vmul.f32 %v628, %v634
  %v637 = vmul.f32 %v633, %v634
  %v638 = vsub.f32 %v607, %v635
  %v639 = vsub.f32 %v608, %v635
  %v640 = vsub.f32 %v609, %v635
  %v641 = vsub.f32 %v610, %v635
  %v642 = vsub.f32 %v611, %v636
  %v643 = vsub.f32 %v612, %v636
  %v644 = vsub.f32 %v613, %v636
  %v645 = vsub.f32 %v614, %v636
  %v646 = vsub.f32 %v615, %v637
  %v647 = vsub.f32 %v616, %v637
  %v648 = vsub.f32 %v617, %v637
  %v649 = vsub.f32 %v618, %v637
  %v650 = vmul.f32 %v638, %v638
  %v651 = vmul.f32 %v639, %v639
  %v652 = vmul.f32 %v640, %v640
  %v653 = vmul.f32 %v641, %v641
  %v654 = vmul.f32 %v642, %v642
  %v655 = vmul.f32 %v643, %v643
  %v656 = vmul.f32 %v644, %v644
  %v657 = vmul.f32 %v645, %v645
  %v658 = vmul.f32 %v646, %v646
  %v659 = vmul.f32 %v647, %v647
  %v660 = vmul.f32 %v648, %v648
  %v661 = vmul.f32 %v649, %v649
  %v662 = vadd.f32 %v650, %v651
  %v663 = vadd.f32 %v662, %v652
  %v664 = vadd.f32 %v663, %v653
  %665 = vadd.xlane.f32.xlu0 %v664
  %v666 = vpop.xlane.xlu0 %665
  %v667 = vadd.f32 %v654, %v655
  %v668 = vadd.f32 %v667, %v656
  %v669 = vadd.f32 %v668, %v657
  %670 = vadd.xlane.f32.xlu0 %v669
  %v671 = vpop.xlane.xlu0 %670
  %v672 = vadd.f32 %v658, %v659
  %v673 = vadd.f32 %v672, %v660
  %v674 = vadd.f32 %v673, %v661
  %675 = vadd.xlane.f32.xlu0 %v674
  %v676 = vpop.xlane.xlu0 %675
  %v677 = vmul.f32 %v666, %v634
  %v678 = vmul.f32 %v671, %v634
  %v679 = vmul.f32 %v676, %v634
  %v680 = vadd.f32 %v677, 1e-05
  %v681 = vadd.f32 %v678, 1e-05
  %v682 = vadd.f32 %v679, 1e-05
  %v683 = vrsqrt.pop %v680
  %v684 = vrsqrt.pop %v681
  %v685 = vrsqrt.pop %v682
  %v686 = vmul.f32 %v81, %v683
  %v687 = vmul.f32 %v82, %v684
  %v688 = vmul.f32 %v83, %v685
  %690 = vset.pattern.permute.xlu0 1
  %691 = vperm.xlu0 %690, %v686
  %v692 = vpop.permute.xlu0 %691
  %695 = vset.pattern.permute.xlu0 1
  %696 = vperm.xlu0 %695, %v687
  %v697 = vpop.permute.xlu0 %696
  %700 = vset.pattern.permute.xlu0 1
  %701 = vperm.xlu0 %700, %v688
  %v702 = vpop.permute.xlu0 %701
  %v704 = vmul.f32 %v638, %v692
  %v705 = vmul.f32 %v639, %v692
  %v706 = vmul.f32 %v640, %v692
  %v707 = vmul.f32 %v641, %v692
  %v708 = vmul.f32 %v642, %v697
  %v709 = vmul.f32 %v643, %v697
  %v710 = vmul.f32 %v644, %v697
  %v711 = vmul.f32 %v645, %v697
  %v712 = vmul.f32 %v646, %v702
  %v713 = vmul.f32 %v647, %v702
  %v714 = vmul.f32 %v648, %v702
  %v715 = vmul.f32 %v649, %v702
  %716 = vset.pattern.permute.xlu0 2
  %717 = vperm.xlu0 %716, %v81
  %v718 = vpop.permute.xlu0 %717
  %720 = vset.pattern.permute.xlu0 2
  %721 = vperm.xlu0 %720, %v82
  %v722 = vpop.permute.xlu0 %721
  %724 = vset.pattern.permute.xlu0 2
  %725 = vperm.xlu0 %724, %v83
  %v726 = vpop.permute.xlu0 %725
  %v728 = vadd.f32 %v704, %v718
  %v729 = vadd.f32 %v705, %v718
  %v730 = vadd.f32 %v706, %v718
  %v731 = vadd.f32 %v707, %v718
  %v732 = vadd.f32 %v708, %v722
  %v733 = vadd.f32 %v709, %v722
  %v734 = vadd.f32 %v710, %v722
  %v735 = vadd.f32 %v711, %v722
  %v736 = vadd.f32 %v712, %v726
  %v737 = vadd.f32 %v713, %v726
  %v738 = vadd.f32 %v714, %v726
  %v739 = vadd.f32 %v715, %v726
  %v740 = vpack.c.bf16 %v732, %v728
  %v741 = vpack.c.bf16 %v733, %v729
  %v742 = vpack.c.bf16 %v734, %v730
  %v743 = vpack.c.bf16 %v735, %v731
  %v744 = vpack.c.bf16 %v736, %v736
  %v745 = vpack.c.bf16 %v737, %v737
  %v746 = vpack.c.bf16 %v738, %v738
  %v747 = vpack.c.bf16 %v739, %v739
  %v756 = vunpack.c.l.b16 %v740
  %v757 = vunpack.c.l.b16 %v741
  %v758 = vunpack.c.l.b16 %v742
  %v759 = vunpack.c.l.b16 %v743
  %v760 = vunpack.c.h.b16 %v740
  %v761 = vunpack.c.h.b16 %v741
  %v762 = vunpack.c.h.b16 %v742
  %v763 = vunpack.c.h.b16 %v743
  %v764 = vunpack.c.l.b16 %v744
  %v765 = vunpack.c.l.b16 %v745
  %v766 = vunpack.c.l.b16 %v746
  %v767 = vunpack.c.l.b16 %v747
  %v768 = vpack.c.b16 %v757, %v756
  %v769 = vpack.c.b16 %v759, %v758
  %v770 = vpack.c.b16 %v761, %v760
  %v771 = vpack.c.b16 %v763, %v762
  %v772 = vpack.c.b16 %v765, %v764
  %v773 = vpack.c.b16 %v767, %v766
  %780 = vst [vmem:[%s3] sm:$0xff] %v768
  %781 = vst [vmem:[%s3 + $0x8] sm:$0xff] %v769
  %782 = vst [vmem:[%s3 + $0x10] sm:$0xff] %v770
  %783 = vst [vmem:[%s3 + $0x18] sm:$0xff] %v771
  %784 = vst [vmem:[%s3 + $0x20] sm:$0xff] %v772
  %785 = vst [vmem:[%s3 + $0x28] sm:$0xff] %v773
  // Predicated region
  $region14: #{_forward.5} parent=0 // pred_check
    _
  $region15: #{_forward.5} parent=0 // pred_check_branch
    %787 = sbr.rel (0) target = $region17
  $region16: #{_forward.5} parent=0 // pred_region
    _
  $region17: #{_forward.5} parent=0 // pred_fallthru
    _
  // Predicated region
  $region18: #{_forward.5} parent=0 // pred_check
    _
  $region19: #{_forward.5} parent=0 // pred_check_branch
    %789 = sbr.rel (0) target = $region21
  $region20: #{_forward.5} parent=0 // pred_region
    _
  $region21: #{_forward.5} parent=0 // pred_fallthru
    _

// kernel: _forward.6
$region0: #{_forward.6}
  #allocation0 [shape = 'u32[]', space=smem, size = 0x4, offset = 0x4, fixed_abs, tag = 'smem constant byte address 0x4 - core index']
  #allocation1 [shape = 'u32[144,128]{1,0:T(1,128)}', space=vmem, size = 0x12000, scoped, tag = 'internal scratch']
  %s0 = inlined_call_operand.vmem [shape: bf16[128,216], index: 0, kind: input, shape index: {}]
  %s1 = inlined_call_operand.vmem [shape: bf16[24,216], index: 1, kind: input, shape index: {}]
  %s2 = inlined_call_operand.vmem [shape: f32[24,3], index: 2, kind: input, shape index: {}]
  %s3 = inlined_call_operand.vmem [shape: bf16[24,128], index: 3, kind: output, shape index: {}]
  %s4 = sld [smem:[#allocation0]]
  $region22: #{_forward.6} parent=0
    _
  %s6 = ssub.s32 1, %s4
  %s7 = scalar_select 0, %s6, %s4
  // Predicated region
  $region2: #{_forward.6} parent=0 // pred_check
    _
  $region3: #{_forward.6} parent=0 // pred_check_branch
    %9 = sbr.rel (0) target = $region5
  $region4: #{_forward.6} parent=0 // pred_region
    _
  $region5: #{_forward.6} parent=0 // pred_fallthru
    _
  // Predicated region
  $region6: #{_forward.6} parent=0 // pred_check
    _
  $region7: #{_forward.6} parent=0 // pred_check_branch
    %11 = sbr.rel (0) target = $region9
  $region8: #{_forward.6} parent=0 // pred_region
    _
  $region9: #{_forward.6} parent=0 // pred_fallthru
    _
  // Predicated region
  $region10: #{_forward.6} parent=0 // pred_check
    _
  $region11: #{_forward.6} parent=0 // pred_check_branch
    %13 = sbr.rel (0) target = $region13
  $region12: #{_forward.6} parent=0 // pred_region
    _
  $region13: #{_forward.6} parent=0 // pred_fallthru
    _
  %v15 = vld [vmem:[%s1] sm:$0xff]
  %v16 = vld [vmem:[%s1 + $0x8] sm:$0xff]
  %v17 = vld [vmem:[%s1 + $0x10] sm:$0xff]
  %v18 = vld [vmem:[%s0] sm:$0xff]
  %v19 = vld [vmem:[%s0 + $0x8] sm:$0xff]
  %v20 = vld [vmem:[%s0 + $0x10] sm:$0xff]
  %v21 = vld [vmem:[%s0 + $0x18] sm:$0xff]
  %v22 = vld [vmem:[%s0 + $0x20] sm:$0xff]
  %v23 = vld [vmem:[%s0 + $0x28] sm:$0xff]
  %v24 = vld [vmem:[%s0 + $0x30] sm:$0xff]
  %v25 = vld [vmem:[%s0 + $0x38] sm:$0xff]
  %v26 = vld [vmem:[%s0 + $0x40] sm:$0xff]
  %v27 = vld [vmem:[%s0 + $0x48] sm:$0xff]
  %v28 = vld [vmem:[%s0 + $0x50] sm:$0xff]
  %v29 = vld [vmem:[%s0 + $0x58] sm:$0xff]
  %v30 = vld [vmem:[%s0 + $0x60] sm:$0xff]
  %v31 = vld [vmem:[%s0 + $0x68] sm:$0xff]
  %v32 = vld [vmem:[%s0 + $0x70] sm:$0xff]
  %v33 = vld [vmem:[%s0 + $0x78] sm:$0xff]
  %v34 = vld [vmem:[%s2] sm:$0xff]
  %v35 = vld [vmem:[%s2 + $0x8] sm:$0xff]
  %v36 = vld [vmem:[%s2 + $0x10] sm:$0xff]
  %38 = vset.pattern.permute.xlu0 0
  %39 = vperm.xlu0 %38, %v34
  %v40 = vpop.permute.xlu0 %39
  %43 = vset.pattern.permute.xlu0 0
  %44 = vperm.xlu0 %43, %v35
  %v45 = vpop.permute.xlu0 %44
  %48 = vset.pattern.permute.xlu0 0
  %49 = vperm.xlu0 %48, %v36
  %v50 = vpop.permute.xlu0 %49
  %v55 = vunpack.c.l.b16 %v15
  %v56 = vunpack.c.h.b16 %v15
  %v57 = vunpack.c.l.b16 %v16
  %v58 = vunpack.c.h.b16 %v16
  %v59 = vunpack.c.l.b16 %v17
  %v60 = vunpack.c.h.b16 %v17
  %v61 = vpack.c.b16 %v57, %v55
  %v62 = vpack.c.b16 %v58, %v56
  %v63 = vpack.c.b16 %v59, %v59
  %v64 = vpack.c.b16 %v60, %v60
  %v83 = vunpack.c.l.b16 %v18
  %v84 = vunpack.c.h.b16 %v18
  %v85 = vunpack.c.l.b16 %v19
  %v86 = vunpack.c.h.b16 %v19
  %v87 = vunpack.c.l.b16 %v20
  %v88 = vunpack.c.h.b16 %v20
  %v89 = vunpack.c.l.b16 %v21
  %v90 = vunpack.c.h.b16 %v21
  %v91 = vunpack.c.l.b16 %v22
  %v92 = vunpack.c.h.b16 %v22
  %v93 = vunpack.c.l.b16 %v23
  %v94 = vunpack.c.h.b16 %v23
  %v95 = vunpack.c.l.b16 %v24
  %v96 = vunpack.c.h.b16 %v24
  %v97 = vunpack.c.l.b16 %v25
  %v98 = vunpack.c.h.b16 %v25
  %v99 = vunpack.c.l.b16 %v26
  %v100 = vunpack.c.h.b16 %v26
  %v101 = vunpack.c.l.b16 %v27
  %v102 = vunpack.c.h.b16 %v27
  %v103 = vunpack.c.l.b16 %v28
  %v104 = vunpack.c.h.b16 %v28
  %v105 = vunpack.c.l.b16 %v29
  %v106 = vunpack.c.h.b16 %v29
  %v107 = vunpack.c.l.b16 %v30
  %v108 = vunpack.c.h.b16 %v30
  %v109 = vunpack.c.l.b16 %v31
  %v110 = vunpack.c.h.b16 %v31
  %v111 = vunpack.c.l.b16 %v32
  %v112 = vunpack.c.h.b16 %v32
  %v113 = vunpack.c.l.b16 %v33
  %v114 = vunpack.c.h.b16 %v33
  %v115 = vpack.c.b16 %v85, %v83
  %v116 = vpack.c.b16 %v86, %v84
  %v117 = vpack.c.b16 %v89, %v87
  %v118 = vpack.c.b16 %v90, %v88
  %v119 = vpack.c.b16 %v93, %v91
  %v120 = vpack.c.b16 %v94, %v92
  %v121 = vpack.c.b16 %v97, %v95
  %v122 = vpack.c.b16 %v98, %v96
  %v123 = vpack.c.b16 %v101, %v99
  %v124 = vpack.c.b16 %v102, %v100
  %v125 = vpack.c.b16 %v105, %v103
  %v126 = vpack.c.b16 %v106, %v104
  %v127 = vpack.c.b16 %v109, %v107
  %v128 = vpack.c.b16 %v110, %v108
  %v129 = vpack.c.b16 %v113, %v111
  %v130 = vpack.c.b16 %v114, %v112
  %vm139 = vcmask 719872
  %v141 = vsel %vm139, %v62, 0
  %v144 = vsel %vm139, %v64, 0
  %v147 = vsel %vm139, %v116, 0
  %v150 = vsel %vm139, %v118, 0
  %v153 = vsel %vm139, %v120, 0
  %v156 = vsel %vm139, %v122, 0
  %v159 = vsel %vm139, %v124, 0
  %v162 = vsel %vm139, %v126, 0
  %v165 = vsel %vm139, %v128, 0
  %v168 = vsel %vm139, %v130, 0
  %170 = vmatprep.subr.bf16.mxu0 %v168
  %171 = vmatpush1.bf16.xpose.msra.mxu0 %v129
  %172 = vmatprep.subr.bf16.mxu0 %v165
  %173 = vmatpush1.bf16.xpose.msra.mxu0 %v127
  %174 = vmatprep.subr.bf16.mxu0 %v162
  %175 = vmatpush1.bf16.xpose.msra.mxu0 %v125
  %176 = vmatprep.subr.bf16.mxu0 %v159
  %177 = vmatpush1.bf16.xpose.msra.mxu0 %v123
  %178 = vmatprep.subr.bf16.mxu0 %v156
  %179 = vmatpush1.bf16.xpose.msra.mxu0 %v121
  %180 = vmatprep.subr.bf16.mxu0 %v153
  %181 = vmatpush1.bf16.xpose.msra.mxu0 %v119
  %182 = vmatprep.subr.bf16.mxu0 %v150
  %183 = vmatpush1.bf16.xpose.msra.mxu0 %v117
  %184 = vmatprep.subr.bf16.mxu0 %v147
  %185 = vmatpush1.bf16.xpose.msra.mxu0 %v115
  %186 = vmatprep.subr.bf16.mxu0 0
  %187 = vmatpush2.bf16.xpose.msra.mxu0 0
  %188 = vmatprep.subr.bf16.mxu0 0
  %189 = vmatpush2.bf16.xpose.msra.mxu0 0
  %190 = vmatprep.subr.bf16.mxu0 0
  %191 = vmatpush2.bf16.xpose.msra.mxu0 0
  %192 = vmatprep.subr.bf16.mxu0 0
  %193 = vmatpush2.bf16.xpose.msra.mxu0 0
  %194 = vmatprep.subr.bf16.mxu0 0
  %195 = vmatpush2.bf16.xpose.msra.mxu0 0
  %196 = vmatprep.subr.bf16.mxu0 0
  %197 = vmatpush2.bf16.xpose.msra.mxu0 0
  %198 = vmatprep.subr.bf16.mxu0 0
  %199 = vmatpush2.bf16.xpose.msra.mxu0 0
  %200 = vmatprep.subr.bf16.mxu0 0
  %201 = vmatpush2.bf16.xpose.msra.mxu0 0
  %202 = vmatprep.mubr.bf16.mxu0 %v141
  %203 = vmatmul.mubr.bf16.gmra.mxu0 %v61
  %v204 = vpop.f32.mrf.mxu0
  %v205 = vadd.f32 %v40, %v204
  %v206 = vpop.f32.mrf.mxu0
  %v207 = vpop.f32.mrf.mxu0
  %v208 = vadd.f32 %v45, %v207
  %v209 = vpop.f32.mrf.mxu0
  %210 = vmatprep.mubr.bf16.mxu0 %v144
  %211 = vmatmul.mubr.bf16.gmra.mxu0 %v63
  %v212 = vpop.f32.mrf.mxu0
  %v213 = vadd.f32 %v50, %v212
  %v214 = vpop.f32.mrf.mxu0
  %v215 = vpop.f32.mrf.mxu0
  %v216 = vpop.f32.mrf.mxu0
  %217 = vdwg.mxu0
  %v218 = vmax.f32 %v205, 0.0
  %v219 = vmax.f32 %v208, 0.0
  %v220 = vmax.f32 %v213, 0.0
  %221 = vadd.xlane.f32.xlu0 %v218
  %v222 = vpop.xlane.xlu0 %221
  %223 = vadd.xlane.f32.xlu0 %v219
  %v224 = vpop.xlane.xlu0 %223
  %225 = vadd.xlane.f32.xlu0 %v220
  %v226 = vpop.xlane.xlu0 %225
  %v227 = vrcp.pop 128.0
  %v228 = vmul.f32 %v222, %v227
  %v229 = vmul.f32 %v224, %v227
  %v230 = vmul.f32 %v226, %v227
  %v231 = vsub.f32 %v218, %v228
  %v232 = vsub.f32 %v219, %v229
  %v233 = vsub.f32 %v220, %v230
  %v234 = vmul.f32 %v231, %v231
  %v235 = vmul.f32 %v232, %v232
  %v236 = vmul.f32 %v233, %v233
  %237 = vadd.xlane.f32.xlu0 %v234
  %v238 = vpop.xlane.xlu0 %237
  %239 = vadd.xlane.f32.xlu0 %v235
  %v240 = vpop.xlane.xlu0 %239
  %241 = vadd.xlane.f32.xlu0 %v236
  %v242 = vpop.xlane.xlu0 %241
  %v243 = vmul.f32 %v238, %v227
  %v244 = vmul.f32 %v240, %v227
  %v245 = vmul.f32 %v242, %v227
  %v246 = vadd.f32 %v243, 1e-05
  %v247 = vadd.f32 %v244, 1e-05
  %v248 = vadd.f32 %v245, 1e-05
  %v249 = vrsqrt.pop %v246
  %v250 = vrsqrt.pop %v247
  %v251 = vrsqrt.pop %v248
  %v252 = vmul.f32 %v34, %v249
  %v253 = vmul.f32 %v35, %v250
  %v254 = vmul.f32 %v36, %v251
  %256 = vset.pattern.permute.xlu0 1
  %257 = vperm.xlu0 %256, %v252
  %v258 = vpop.permute.xlu0 %257
  %261 = vset.pattern.permute.xlu0 1
  %262 = vperm.xlu0 %261, %v253
  %v263 = vpop.permute.xlu0 %262
  %266 = vset.pattern.permute.xlu0 1
  %267 = vperm.xlu0 %266, %v254
  %v268 = vpop.permute.xlu0 %267
  %v270 = vmul.f32 %v231, %v258
  %v271 = vmul.f32 %v232, %v263
  %v272 = vmul.f32 %v233, %v268
  %273 = vset.pattern.permute.xlu0 2
  %274 = vperm.xlu0 %273, %v34
  %v275 = vpop.permute.xlu0 %274
  %277 = vset.pattern.permute.xlu0 2
  %278 = vperm.xlu0 %277, %v35
  %v279 = vpop.permute.xlu0 %278
  %281 = vset.pattern.permute.xlu0 2
  %282 = vperm.xlu0 %281, %v36
  %v283 = vpop.permute.xlu0 %282
  %v285 = vadd.f32 %v270, %v275
  %v286 = vadd.f32 %v271, %v279
  %v287 = vadd.f32 %v272, %v283
  %v288 = vpack.c.bf16 %v286, %v285
  %v289 = vpack.c.bf16 %v287, %v287
  %v292 = vunpack.c.l.b16 %v288
  %v293 = vunpack.c.h.b16 %v288
  %v294 = vunpack.c.l.b16 %v289
  %v295 = vpack.c.b16 %v292, %v292
  %v296 = vpack.c.b16 %v293, %v293
  %v297 = vpack.c.b16 %v294, %v294
  %301 = vst [vmem:[%s3] sm:$0xf] %v295
  %302 = vst [vmem:[%s3 + $0x4] sm:$0xf] %v296
  %303 = vst [vmem:[%s3 + $0x8] sm:$0xf] %v297
  // Predicated region
  $region14: #{_forward.6} parent=0 // pred_check
    _
  $region15: #{_forward.6} parent=0 // pred_check_branch
    %305 = sbr.rel (0) target = $region17
  $region16: #{_forward.6} parent=0 // pred_region
    _
  $region17: #{_forward.6} parent=0 // pred_fallthru
    _
  // Predicated region
  $region18: #{_forward.6} parent=0 // pred_check
    _
  $region19: #{_forward.6} parent=0 // pred_check_branch
    %307 = sbr.rel (0) target = $region21
  $region20: #{_forward.6} parent=0 // pred_region
    _
  $region21: #{_forward.6} parent=0 // pred_fallthru
    _

// kernel: _forward.7
$region0: #{_forward.7}
  #allocation0 [shape = 'u32[]', space=smem, size = 0x4, offset = 0x4, fixed_abs, tag = 'smem constant byte address 0x4 - core index']
  #allocation1 [shape = 'u32[144,128]{1,0:T(1,128)}', space=vmem, size = 0x12000, scoped, tag = 'internal scratch']
  %s0 = inlined_call_operand.vmem [shape: bf16[32,216], index: 0, kind: input, shape index: {}]
  %s1 = inlined_call_operand.vmem [shape: bf16[24,216], index: 1, kind: input, shape index: {}]
  %s2 = inlined_call_operand.vmem [shape: f32[24,3], index: 2, kind: input, shape index: {}]
  %s3 = inlined_call_operand.vmem [shape: f32[24,32], index: 3, kind: output, shape index: {}]
  %s4 = sld [smem:[#allocation0]]
  $region22: #{_forward.7} parent=0
    _
  %s6 = ssub.s32 1, %s4
  %s7 = scalar_select 0, %s6, %s4
  // Predicated region
  $region2: #{_forward.7} parent=0 // pred_check
    _
  $region3: #{_forward.7} parent=0 // pred_check_branch
    %9 = sbr.rel (0) target = $region5
  $region4: #{_forward.7} parent=0 // pred_region
    _
  $region5: #{_forward.7} parent=0 // pred_fallthru
    _
  // Predicated region
  $region6: #{_forward.7} parent=0 // pred_check
    _
  $region7: #{_forward.7} parent=0 // pred_check_branch
    %11 = sbr.rel (0) target = $region9
  $region8: #{_forward.7} parent=0 // pred_region
    _
  $region9: #{_forward.7} parent=0 // pred_fallthru
    _
  // Predicated region
  $region10: #{_forward.7} parent=0 // pred_check
    _
  $region11: #{_forward.7} parent=0 // pred_check_branch
    %13 = sbr.rel (0) target = $region13
  $region12: #{_forward.7} parent=0 // pred_region
    _
  $region13: #{_forward.7} parent=0 // pred_fallthru
    _
  %v15 = vld [vmem:[%s1] sm:$0xff]
  %v16 = vld [vmem:[%s1 + $0x8] sm:$0xff]
  %v17 = vld [vmem:[%s1 + $0x10] sm:$0xff]
  %v18 = vld [vmem:[%s0] sm:$0xff]
  %v19 = vld [vmem:[%s0 + $0x8] sm:$0xff]
  %v20 = vld [vmem:[%s0 + $0x10] sm:$0xff]
  %v21 = vld [vmem:[%s0 + $0x18] sm:$0xff]
  %v22 = vld [vmem:[%s2] sm:$0xff]
  %v23 = vld [vmem:[%s2 + $0x8] sm:$0xff]
  %v24 = vld [vmem:[%s2 + $0x10] sm:$0xff]
  %26 = vset.pattern.permute.xlu0 0
  %27 = vperm.xlu0 %26, %v22
  %v28 = vpop.permute.xlu0 %27
  %31 = vset.pattern.permute.xlu0 0
  %32 = vperm.xlu0 %31, %v23
  %v33 = vpop.permute.xlu0 %32
  %36 = vset.pattern.permute.xlu0 0
  %37 = vperm.xlu0 %36, %v24
  %v38 = vpop.permute.xlu0 %37
  %v43 = vunpack.c.l.b16 %v15
  %v44 = vunpack.c.h.b16 %v15
  %v45 = vunpack.c.l.b16 %v16
  %v46 = vunpack.c.h.b16 %v16
  %v47 = vunpack.c.l.b16 %v17
  %v48 = vunpack.c.h.b16 %v17
  %v49 = vpack.c.b16 %v45, %v43
  %v50 = vpack.c.b16 %v46, %v44
  %v51 = vpack.c.b16 %v47, %v47
  %v52 = vpack.c.b16 %v48, %v48
  %v59 = vunpack.c.l.b16 %v18
  %v60 = vunpack.c.h.b16 %v18
  %v61 = vunpack.c.l.b16 %v19
  %v62 = vunpack.c.h.b16 %v19
  %v63 = vunpack.c.l.b16 %v20
  %v64 = vunpack.c.h.b16 %v20
  %v65 = vunpack.c.l.b16 %v21
  %v66 = vunpack.c.h.b16 %v21
  %v67 = vpack.c.b16 %v61, %v59
  %v68 = vpack.c.b16 %v62, %v60
  %v69 = vpack.c.b16 %v65, %v63
  %v70 = vpack.c.b16 %v66, %v64
  %vm73 = vcmask 719872
  %v75 = vsel %vm73, %v50, 0
  %v78 = vsel %vm73, %v52, 0
  %v81 = vsel %vm73, %v68, 0
  %v84 = vsel %vm73, %v70, 0
  %86 = vmatprep.subr.bf16.mxu0 0
  %87 = vmatpush1.bf16.xpose.msra.mxu0 0
  %88 = vmatprep.subr.bf16.mxu0 0
  %89 = vmatpush1.bf16.xpose.msra.mxu0 0
  %90 = vmatprep.subr.bf16.mxu0 0
  %91 = vmatpush1.bf16.xpose.msra.mxu0 0
  %92 = vmatprep.subr.bf16.mxu0 0
  %93 = vmatpush1.bf16.xpose.msra.mxu0 0
  %94 = vmatprep.subr.bf16.mxu0 0
  %95 = vmatpush1.bf16.xpose.msra.mxu0 0
  %96 = vmatprep.subr.bf16.mxu0 0
  %97 = vmatpush1.bf16.xpose.msra.mxu0 0
  %98 = vmatprep.subr.bf16.mxu0 %v84
  %99 = vmatpush1.bf16.xpose.msra.mxu0 %v69
  %100 = vmatprep.subr.bf16.mxu0 %v81
  %101 = vmatpush1.bf16.xpose.msra.mxu0 %v67
  %102 = vmatprep.subr.bf16.mxu0 0
  %103 = vmatpush2.bf16.xpose.msra.mxu0 0
  %104 = vmatprep.subr.bf16.mxu0 0
  %105 = vmatpush2.bf16.xpose.msra.mxu0 0
  %106 = vmatprep.subr.bf16.mxu0 0
  %107 = vmatpush2.bf16.xpose.msra.mxu0 0
  %108 = vmatprep.subr.bf16.mxu0 0
  %109 = vmatpush2.bf16.xpose.msra.mxu0 0
  %110 = vmatprep.subr.bf16.mxu0 0
  %111 = vmatpush2.bf16.xpose.msra.mxu0 0
  %112 = vmatprep.subr.bf16.mxu0 0
  %113 = vmatpush2.bf16.xpose.msra.mxu0 0
  %114 = vmatprep.subr.bf16.mxu0 0
  %115 = vmatpush2.bf16.xpose.msra.mxu0 0
  %116 = vmatprep.subr.bf16.mxu0 0
  %117 = vmatpush2.bf16.xpose.msra.mxu0 0
  %118 = vmatprep.mubr.bf16.mxu0 %v75
  %119 = vmatmul.mubr.bf16.gmra.mxu0 %v49
  %v120 = vpop.f32.mrf.mxu0
  %v121 = vadd.f32 %v28, %v120
  %v122 = vpop.f32.mrf.mxu0
  %v123 = vpop.f32.mrf.mxu0
  %v124 = vadd.f32 %v33, %v123
  %v125 = vpop.f32.mrf.mxu0
  %126 = vmatprep.mubr.bf16.mxu0 %v78
  %127 = vmatmul.mubr.bf16.gmra.mxu0 %v51
  %v128 = vpop.f32.mrf.mxu0
  %v129 = vadd.f32 %v38, %v128
  %v130 = vpop.f32.mrf.mxu0
  %v131 = vpop.f32.mrf.mxu0
  %v132 = vpop.f32.mrf.mxu0
  %133 = vdwg.mxu0
  %v134 = vmax.f32 %v121, 0.0
  %v135 = vmax.f32 %v124, 0.0
  %v136 = vmax.f32 %v129, 0.0
  %vm137 = vcmask 261120
  %v138 = vsel %vm137, %v134, 0.0
  %139 = vadd.xlane.f32.xlu0 %v138
  %v140 = vpop.xlane.xlu0 %139
  %v141 = vsel %vm137, %v135, 0.0
  %142 = vadd.xlane.f32.xlu0 %v141
  %v143 = vpop.xlane.xlu0 %142
  %v144 = vsel %vm137, %v136, 0.0
  %145 = vadd.xlane.f32.xlu0 %v144
  %v146 = vpop.xlane.xlu0 %145
  %v147 = vrcp.pop 32.0
  %v148 = vmul.f32 %v140, %v147
  %v149 = vmul.f32 %v143, %v147
  %v150 = vmul.f32 %v146, %v147
  %v151 = vsub.f32 %v134, %v148
  %v152 = vsub.f32 %v135, %v149
  %v153 = vsub.f32 %v136, %v150
  %v154 = vmul.f32 %v151, %v151
  %v155 = vmul.f32 %v152, %v152
  %v156 = vmul.f32 %v153, %v153
  %v157 = vsel %vm137, %v154, 0.0
  %158 = vadd.xlane.f32.xlu0 %v157
  %v159 = vpop.xlane.xlu0 %158
  %v160 = vsel %vm137, %v155, 0.0
  %161 = vadd.xlane.f32.xlu0 %v160
  %v162 = vpop.xlane.xlu0 %161
  %v163 = vsel %vm137, %v156, 0.0
  %164 = vadd.xlane.f32.xlu0 %v163
  %v165 = vpop.xlane.xlu0 %164
  %v166 = vmul.f32 %v159, %v147
  %v167 = vmul.f32 %v162, %v147
  %v168 = vmul.f32 %v165, %v147
  %v169 = vadd.f32 %v166, 1e-05
  %v170 = vadd.f32 %v167, 1e-05
  %v171 = vadd.f32 %v168, 1e-05
  %v172 = vrsqrt.pop %v169
  %v173 = vrsqrt.pop %v170
  %v174 = vrsqrt.pop %v171
  %v175 = vmul.f32 %v22, %v172
  %v176 = vmul.f32 %v23, %v173
  %v177 = vmul.f32 %v24, %v174
  %179 = vset.pattern.permute.xlu0 1
  %180 = vperm.xlu0 %179, %v175
  %v181 = vpop.permute.xlu0 %180
  %184 = vset.pattern.permute.xlu0 1
  %185 = vperm.xlu0 %184, %v176
  %v186 = vpop.permute.xlu0 %185
  %189 = vset.pattern.permute.xlu0 1
  %190 = vperm.xlu0 %189, %v177
  %v191 = vpop.permute.xlu0 %190
  %v193 = vmul.f32 %v151, %v181
  %v194 = vmul.f32 %v152, %v186
  %v195 = vmul.f32 %v153, %v191
  %196 = vset.pattern.permute.xlu0 2
  %197 = vperm.xlu0 %196, %v22
  %v198 = vpop.permute.xlu0 %197
  %200 = vset.pattern.permute.xlu0 2
  %201 = vperm.xlu0 %200, %v23
  %v202 = vpop.permute.xlu0 %201
  %204 = vset.pattern.permute.xlu0 2
  %205 = vperm.xlu0 %204, %v24
  %v206 = vpop.permute.xlu0 %205
  %v208 = vadd.f32 %v193, %v198
  %v209 = vadd.f32 %v194, %v202
  %v210 = vadd.f32 %v195, %v206
  %211 = vst.msk [vmem:[%s3] sm:$0xff] %vm137, %v208
  %212 = vst.msk [vmem:[%s3 + $0x8] sm:$0xff] %vm137, %v209
  %213 = vst.msk [vmem:[%s3 + $0x10] sm:$0xff] %vm137, %v210
  // Predicated region
  $region14: #{_forward.7} parent=0 // pred_check
    _
  $region15: #{_forward.7} parent=0 // pred_check_branch
    %215 = sbr.rel (0) target = $region17
  $region16: #{_forward.7} parent=0 // pred_region
    _
  $region17: #{_forward.7} parent=0 // pred_fallthru
    _
  // Predicated region
  $region18: #{_forward.7} parent=0 // pred_check
    _
  $region19: #{_forward.7} parent=0 // pred_check_branch
    %217 = sbr.rel (0) target = $region21
  $region20: #{_forward.7} parent=0 // pred_region
    _
  $region21: #{_forward.7} parent=0 // pred_fallthru
    _

</llo_original>
